<compile_context>
chip_gen: v7x
topology: tpu7x:2x2x1
jax: 0.10.0
libtpu: 0.0.40
codegen_flags: <defaults>
</compile_context>

<pallas_src>
import functools

import jax
import jax.numpy as jnp
from jax.experimental import pallas as pl
from jax.experimental.pallas import tpu as pltpu

# ---------------- config (small, BERT-like) ----------------
VOCAB = 100
VOCAB_PAD = 128          # vocab rows padded to one full lane width (review item)
HIDDEN = 32
N_HEADS = 2
HEAD_DIM = HIDDEN // N_HEADS
N_LAYERS = 2
INTERMEDIATE = 64
FF_PAD = 128             # FFN intermediate padded to 128 lanes (zero-padded weights)
MAX_POS = 16
OUTPUT_DIM = 2
OUT_PAD = 128            # lane-dense padded logits width (sliced to OUTPUT_DIM outside)
LANE = 128
LN_EPS = 1e-12

# ---- packed-buffer row offsets (all multiples of 8 -> sublane aligned) ----
# wn: lane width = HIDDEN (32)
NR_WEMB = 0
NR_PEMB = NR_WEMB + VOCAB_PAD                       # 128
NR_CW1 = NR_PEMB + MAX_POS                          # 144
NR_LAYER0 = NR_CW1 + HIDDEN                         # 176
NR_PER_LAYER = HIDDEN + FF_PAD                      # wao rows + padded-wo rows = 160
NR_TOTAL = NR_LAYER0 + N_LAYERS * NR_PER_LAYER      # 496

# ww: lane width = 128
WW_PER_LAYER = 2 * HIDDEN                           # wqkv rows + wi rows = 64
WW_CW2 = N_LAYERS * WW_PER_LAYER                    # 128
WW_TOTAL = WW_CW2 + HIDDEN                          # 160

# vec: one 128-lane row per 1-D parameter
VR_EMB_G, VR_EMB_B, VR_TYPE, VR_CB1, VR_CB2 = 0, 1, 2, 3, 4
VR_LAYER0 = 8
VR_PER_LAYER = 8                                    # bqkv, bao, g1, be1, bi, bo, g2, be2
VR_TOTAL = VR_LAYER0 + N_LAYERS * VR_PER_LAYER      # 24


# ---------------- in-kernel helpers ----------------
def _layernorm(x, gamma, beta, eps=LN_EPS):
    mu = jnp.mean(x, axis=-1, keepdims=True)
    var = jnp.mean((x - mu) ** 2, axis=-1, keepdims=True)
    return (x - mu) * jax.lax.rsqrt(var + eps) * gamma + beta


def _gelu(x):
    # TODO(synk): erf-based GELU for exact BERT parity (tanh approximation used).
    c = 0.7978845608028654  # sqrt(2/pi)
    return 0.5 * x * (1.0 + jnp.tanh(c * (x + 0.044715 * x * x * x)))


# ---------------- fused forward kernel ----------------
def fused_forward_kernel(ids_ref, kmask_ref, wn_ref, ww_ref, vec_ref, out_ref,
                         *, batch, seq):
    f32 = jnp.float32
    BS = batch * seq

    def vrow(r, width=LANE):                 # (1, width) bias / LN row from the table
        return vec_ref[r:r + 1, :width]

    # ---- embeddings: word gather as a 128-deep one-hot matmul on the MXU ----
    ids = ids_ref[...]                                               # (BS, 1) int32
    vocab_iota = jax.lax.broadcasted_iota(jnp.int32, (BS, VOCAB_PAD), 1)
    word_oh = (vocab_iota == ids).astype(f32)                        # (BS, 128)
    emb = jnp.dot(word_oh, wn_ref[NR_WEMB:NR_WEMB + VOCAB_PAD, :],
                  preferred_element_type=f32)                        # (BS, H)

    pe = wn_ref[NR_PEMB:NR_PEMB + seq, :]                            # (S, H)
    emb = emb + jnp.concatenate([pe] * batch, axis=0)                # static batch tile
    emb = emb + vrow(VR_TYPE, HIDDEN)                                # token_type_id == 0

    x = _layernorm(emb, vrow(VR_EMB_G, HIDDEN), vrow(VR_EMB_B, HIDDEN))

    # ---- attention bias, generated in-kernel: same-batch block-diag AND live key ----
    qi = jax.lax.broadcasted_iota(jnp.int32, (BS, BS), 0).astype(f32)
    ki = jax.lax.broadcasted_iota(jnp.int32, (BS, BS), 1).astype(f32)
    inv_s = 1.0 / seq
    same_b = jnp.floor((qi + 0.5) * inv_s) == jnp.floor((ki + 0.5) * inv_s)
    keep = same_b & (kmask_ref[...] > 0.5)                           # (BS, BS)
    bias = jnp.where(keep, 0.0, -1e9).astype(f32)

    scale = 1.0 / (HEAD_DIM ** 0.5)

    for l in range(N_LAYERS):                                        # static unroll
        wr = l * WW_PER_LAYER
        nr = NR_LAYER0 + l * NR_PER_LAYER
        vr = VR_LAYER0 + l * VR_PER_LAYER

        # fused QKV projection: one (BS,32)x(32,128) MXU push (lanes 96:128 stay 0)
        qkv = jnp.dot(x, ww_ref[wr:wr + HIDDEN, :],
                      preferred_element_type=f32) + vrow(vr + 0)     # (BS, 128)

        ctx_heads = []
        for h in range(N_HEADS):                                     # static, 2 heads
            q_h = qkv[:, h * HEAD_DIM:(h + 1) * HEAD_DIM]
            k_h = qkv[:, HIDDEN + h * HEAD_DIM:HIDDEN + (h + 1) * HEAD_DIM]
            v_h = qkv[:, 2 * HIDDEN + h * HEAD_DIM:2 * HIDDEN + (h + 1) * HEAD_DIM]

            s = jnp.dot(q_h, k_h.T, preferred_element_type=f32) * scale + bias
            s = s - jnp.max(s, axis=-1, keepdims=True)
            p = jnp.exp(s)
            p = p * pl.reciprocal(jnp.sum(p, axis=-1, keepdims=True), approx=True)
            ctx_heads.append(jnp.dot(p, v_h, preferred_element_type=f32))   # (BS, DH)

        ctx = jnp.concatenate(ctx_heads, axis=-1)                    # (BS, H), head-major
        attn = jnp.dot(ctx, wn_ref[nr:nr + HIDDEN, :],
                       preferred_element_type=f32) + vrow(vr + 1, HIDDEN)

        h1 = _layernorm(x + attn, vrow(vr + 2, HIDDEN), vrow(vr + 3, HIDDEN))

        # FFN: weights zero-padded to 128 lanes / 128 rows -> no activation slicing
        ff = _gelu(jnp.dot(h1, ww_ref[wr + HIDDEN:wr + 2 * HIDDEN, :],
                           preferred_element_type=f32) + vrow(vr + 4))      # (BS, 128)
        ff = jnp.dot(ff, wn_ref[nr + HIDDEN:nr + HIDDEN + FF_PAD, :],
                     preferred_element_type=f32) + vrow(vr + 5, HIDDEN)
        x = _layernorm(h1 + ff, vrow(vr + 6, HIDDEN), vrow(vr + 7, HIDDEN))

    # ---- classifier head on all rows (CLS rows selected outside the kernel) ----
    h = jnp.dot(x, wn_ref[NR_CW1:NR_CW1 + HIDDEN, :],
                preferred_element_type=f32) + vrow(VR_CB1, HIDDEN)
    h = jnp.maximum(h, 0.0)
    # Dropout(p=0.3) is the identity at inference time.
    out_ref[...] = jnp.dot(h, ww_ref[WW_CW2:WW_CW2 + HIDDEN, :],
                           preferred_element_type=f32) + vrow(VR_CB2)


# ---------------- pallas_call wrapper ----------------
def _const_spec(shape):
    nd = len(shape)
    return pl.BlockSpec(shape, lambda *_, _nd=nd: (0,) * _nd)


@jax.jit
def forward(packed, input_ids, attention_mask):
    B, S = input_ids.shape
    assert S <= MAX_POS
    BS = B * S
    ids = input_ids.reshape(BS, 1).astype(jnp.int32)
    km = attention_mask.reshape(1, BS).astype(jnp.float32)

    args = [ids, km, packed["wn"], packed["ww"], packed["vec"]]      # 5 input DMAs total

    logits_pad = pl.pallas_call(
        functools.partial(fused_forward_kernel, batch=B, seq=S),
        out_shape=jax.ShapeDtypeStruct((BS, OUT_PAD), jnp.float32),
        grid=(1,),
        in_specs=[_const_spec(a.shape) for a in args],
        out_specs=_const_spec((BS, OUT_PAD)),
        compiler_params=pltpu.CompilerParams(dimension_semantics=("arbitrary",)),
    )(*args)
    # CLS token rows are at flattened indices b*S; slice off the lane padding.
    return logits_pad[0::S, :OUTPUT_DIM]


# ---------------- parameter init (deterministic) & packing ----------------
def init_params(key):
    keys = iter(jax.random.split(key, 64))

    def nrm(shape):
        return jax.random.normal(next(keys), shape, jnp.float32) * 0.02

    def xavier(fan_in, fan_out):
        lim = (6.0 / (fan_in + fan_out)) ** 0.5
        return jax.random.uniform(next(keys), (fan_in, fan_out), jnp.float32, -lim, lim)

    layers = []
    for _ in range(N_LAYERS):
        layers.append(dict(
            wq=nrm((HIDDEN, HIDDEN)), bq=jnp.zeros((HIDDEN,), jnp.float32),
            wk=nrm((HIDDEN, HIDDEN)), bk=jnp.zeros((HIDDEN,), jnp.float32),
            wv=nrm((HIDDEN, HIDDEN)), bv=jnp.zeros((HIDDEN,), jnp.float32),
            wao=nrm((HIDDEN, HIDDEN)), bao=jnp.zeros((HIDDEN,), jnp.float32),
            g1=jnp.ones((HIDDEN,), jnp.float32), be1=jnp.zeros((HIDDEN,), jnp.float32),
            wi=nrm((HIDDEN, INTERMEDIATE)), bi=jnp.zeros((INTERMEDIATE,), jnp.float32),
            wo=nrm((INTERMEDIATE, HIDDEN)), bo=jnp.zeros((HIDDEN,), jnp.float32),
            g2=jnp.ones((HIDDEN,), jnp.float32), be2=jnp.zeros((HIDDEN,), jnp.float32),
        ))

    return dict(
        word_emb=nrm((VOCAB, HIDDEN)),
        pos_emb=nrm((MAX_POS, HIDDEN)),
        type_emb=nrm((2, HIDDEN)),
        emb_ln_g=jnp.ones((HIDDEN,), jnp.float32),
        emb_ln_b=jnp.zeros((HIDDEN,), jnp.float32),
        layers=layers,
        # classifier: xavier_uniform weights, zero biases (matches module init)
        cls_w1=xavier(HIDDEN, HIDDEN), cls_b1=jnp.zeros((HIDDEN,), jnp.float32),
        cls_w2=xavier(HIDDEN, OUTPUT_DIM), cls_b2=jnp.zeros((OUTPUT_DIM,), jnp.float32),
    )


def pack_params(raw):
    """Pack everything into 3 contiguous, lane-aligned f32 buffers."""
    wn = jnp.zeros((NR_TOTAL, HIDDEN), jnp.float32)      # lane width 32
    ww = jnp.zeros((WW_TOTAL, LANE), jnp.float32)        # lane width 128
    vec = jnp.zeros((VR_TOTAL, LANE), jnp.float32)       # 1-D param table

    wn = wn.at[NR_WEMB:NR_WEMB + VOCAB, :].set(raw["word_emb"])      # vocab rows 100->128
    wn = wn.at[NR_PEMB:NR_PEMB + MAX_POS, :].set(raw["pos_emb"])
    wn = wn.at[NR_CW1:NR_CW1 + HIDDEN, :].set(raw["cls_w1"])

    ww = ww.at[WW_CW2:WW_CW2 + HIDDEN, :OUTPUT_DIM].set(raw["cls_w2"])

    vec = vec.at[VR_EMB_G, :HIDDEN].set(raw["emb_ln_g"])
    vec = vec.at[VR_EMB_B, :HIDDEN].set(raw["emb_ln_b"])
    vec = vec.at[VR_TYPE, :HIDDEN].set(raw["type_emb"][0])
    vec = vec.at[VR_CB1, :HIDDEN].set(raw["cls_b1"])
    vec = vec.at[VR_CB2, :OUTPUT_DIM].set(raw["cls_b2"])

    for l, lp in enumerate(raw["layers"]):
        wr = l * WW_PER_LAYER
        nr = NR_LAYER0 + l * NR_PER_LAYER
        vr = VR_LAYER0 + l * VR_PER_LAYER

        wqkv = jnp.concatenate([lp["wq"], lp["wk"], lp["wv"]], axis=1)   # (H, 3H)
        ww = ww.at[wr:wr + HIDDEN, :3 * HIDDEN].set(wqkv)
        ww = ww.at[wr + HIDDEN:wr + 2 * HIDDEN, :INTERMEDIATE].set(lp["wi"])

        wn = wn.at[nr:nr + HIDDEN, :].set(lp["wao"])
        wn = wn.at[nr + HIDDEN:nr + HIDDEN + INTERMEDIATE, :].set(lp["wo"])

        vec = vec.at[vr + 0, :3 * HIDDEN].set(
            jnp.concatenate([lp["bq"], lp["bk"], lp["bv"]]))
        vec = vec.at[vr + 1, :HIDDEN].set(lp["bao"])
        vec = vec.at[vr + 2, :HIDDEN].set(lp["g1"])
        vec = vec.at[vr + 3, :HIDDEN].set(lp["be1"])
        vec = vec.at[vr + 4, :INTERMEDIATE].set(lp["bi"])
        vec = vec.at[vr + 5, :HIDDEN].set(lp["bo"])
        vec = vec.at[vr + 6, :HIDDEN].set(lp["g2"])
        vec = vec.at[vr + 7, :HIDDEN].set(lp["be2"])

    return dict(wn=wn, ww=ww, vec=vec)


if __name__ == "__main__":
    key = jax.random.PRNGKey(0)
    k_params, k_ids = jax.random.split(key)
    packed = pack_params(init_params(k_params))

    B, S = 2, 8
    input_ids = jax.random.randint(k_ids, (B, S), 0, VOCAB, dtype=jnp.int32)
    attention_mask = jnp.ones((B, S), jnp.float32).at[1, 6:].set(0.0)

    logits = forward(packed, input_ids, attention_mask)
    jax.block_until_ready(logits)
    assert logits.shape == (B, OUTPUT_DIM)
    assert bool(jnp.all(jnp.isfinite(logits)))
    print("KERNEL_OK")
</pallas_src>

<mosaic_0001>
module attributes {stable_mosaic.version = 11 : i64} {
  func.func @fused_forward_kernel(%arg0: i32, %arg1: memref<16x1xi32, #tpu.memory_space<vmem>>, %arg2: memref<1x16xf32, #tpu.memory_space<vmem>>, %arg3: memref<496x32xf32, #tpu.memory_space<vmem>>, %arg4: memref<160x128xf32, #tpu.memory_space<vmem>>, %arg5: memref<24x128xf32, #tpu.memory_space<vmem>>, %arg6: memref<16x128xf32, #tpu.memory_space<vmem>>) attributes {dimension_semantics = [#tpu.dimension_semantics<arbitrary>], iteration_bounds = array<i64: 1>, scalar_prefetch = 0 : i64, scratch_operands = 0 : i64, tpu.core_type = #tpu.core_type<tc>, window_params = [{pipeline_mode = #tpu.pipeline_mode<synchronous>, transform_indices = @transform_0, window_bounds = array<i64: 16, 1>}, {pipeline_mode = #tpu.pipeline_mode<synchronous>, transform_indices = @transform_1, window_bounds = array<i64: 1, 16>}, {pipeline_mode = #tpu.pipeline_mode<synchronous>, transform_indices = @transform_2, window_bounds = array<i64: 496, 32>}, {pipeline_mode = #tpu.pipeline_mode<synchronous>, transform_indices = @transform_3, window_bounds = array<i64: 160, 128>}, {pipeline_mode = #tpu.pipeline_mode<synchronous>, transform_indices = @transform_4, window_bounds = array<i64: 24, 128>}, {pipeline_mode = #tpu.pipeline_mode<synchronous>, transform_indices = @transform_5, window_bounds = array<i64: 16, 128>}]} {
    %c0 = arith.constant 0 : index
    %c0_0 = arith.constant 0 : index
    %0 = vector.load %arg1[%c0, %c0_0] : memref<16x1xi32, #tpu.memory_space<vmem>>, vector<16x1xi32>
    %1 = tpu.iota {dimensions = array<i32: 1>} : vector<16x128xi32>
    %2 = vector.broadcast %0 : vector<16x1xi32> to vector<16x128xi32>
    %3 = arith.cmpi eq, %1, %2 : vector<16x128xi32>
    %4 = arith.extui %3 : vector<16x128xi1> to vector<16x128xi32>
    %5 = arith.sitofp %4 : vector<16x128xi32> to vector<16x128xf32>
    %c0_1 = arith.constant 0 : index
    %c0_2 = arith.constant 0 : index
    %6 = vector.load %arg3[%c0_1, %c0_2] : memref<496x32xf32, #tpu.memory_space<vmem>>, vector<128x32xf32>
    %cst = arith.constant dense<0.000000e+00> : vector<16x32xf32>
    %7 = tpu.matmul %5, %6, %cst {dimension_numbers = #tpu.dot_dimension_numbers<[1], [0], [0], [1], [0, 0, 1, 1], [], []>} : vector<16x128xf32>, vector<128x32xf32>, vector<16x32xf32> -> vector<16x32xf32>
    %c128 = arith.constant 128 : index
    %c0_3 = arith.constant 0 : index
    %8 = vector.load %arg3[%c128, %c0_3] : memref<496x32xf32, #tpu.memory_space<vmem>>, vector<8x32xf32>
    %9 = tpu.concatenate %8, %8 in 0 : vector<8x32xf32>, vector<8x32xf32> -> vector<16x32xf32>
    %10 = arith.addf %7, %9 : vector<16x32xf32>
    %c2 = arith.constant 2 : index
    %c0_4 = arith.constant 0 : index
    %11 = vector.load %arg5[%c2, %c0_4] : memref<24x128xf32, #tpu.memory_space<vmem>>, vector<1x32xf32>
    %12 = vector.broadcast %11 : vector<1x32xf32> to vector<16x32xf32>
    %13 = arith.addf %10, %12 : vector<16x32xf32>
    %c0_5 = arith.constant 0 : index
    %c0_6 = arith.constant 0 : index
    %14 = vector.load %arg5[%c0_5, %c0_6] : memref<24x128xf32, #tpu.memory_space<vmem>>, vector<1x32xf32>
    %c1 = arith.constant 1 : index
    %c0_7 = arith.constant 0 : index
    %15 = vector.load %arg5[%c1, %c0_7] : memref<24x128xf32, #tpu.memory_space<vmem>>, vector<1x32xf32>
    %cst_8 = arith.constant dense<0.000000e+00> : vector<16xf32>
    %16 = vector.multi_reduction <add>, %13, %cst_8 [1] : vector<16x32xf32> to vector<16xf32>
    %17 = vector.shape_cast %16 : vector<16xf32> to vector<16x1xf32>
    %cst_9 = arith.constant 3.200000e+01 : f32
    %18 = vector.broadcast %cst_9 : f32 to vector<16x1xf32>
    %19 = arith.divf %17, %18 : vector<16x1xf32>
    %20 = vector.broadcast %19 : vector<16x1xf32> to vector<16x32xf32>
    %21 = arith.subf %13, %20 : vector<16x32xf32>
    %22 = arith.mulf %21, %21 : vector<16x32xf32>
    %cst_10 = arith.constant dense<0.000000e+00> : vector<16xf32>
    %23 = vector.multi_reduction <add>, %22, %cst_10 [1] : vector<16x32xf32> to vector<16xf32>
    %24 = vector.shape_cast %23 : vector<16xf32> to vector<16x1xf32>
    %cst_11 = arith.constant 3.200000e+01 : f32
    %25 = vector.broadcast %cst_11 : f32 to vector<16x1xf32>
    %26 = arith.divf %24, %25 : vector<16x1xf32>
    %27 = vector.broadcast %19 : vector<16x1xf32> to vector<16x32xf32>
    %28 = arith.subf %13, %27 : vector<16x32xf32>
    %cst_12 = arith.constant 9.99999996E-13 : f32
    %29 = vector.broadcast %cst_12 : f32 to vector<16x1xf32>
    %30 = arith.addf %26, %29 : vector<16x1xf32>
    %31 = math.rsqrt %30 : vector<16x1xf32>
    %32 = vector.broadcast %31 : vector<16x1xf32> to vector<16x32xf32>
    %33 = arith.mulf %28, %32 : vector<16x32xf32>
    %34 = vector.broadcast %14 : vector<1x32xf32> to vector<16x32xf32>
    %35 = arith.mulf %33, %34 : vector<16x32xf32>
    %36 = vector.broadcast %15 : vector<1x32xf32> to vector<16x32xf32>
    %37 = arith.addf %35, %36 : vector<16x32xf32>
    %38 = tpu.iota {dimensions = array<i32: 0>} : vector<16x16xi32>
    %39 = arith.sitofp %38 : vector<16x16xi32> to vector<16x16xf32>
    %40 = tpu.iota {dimensions = array<i32: 1>} : vector<16x16xi32>
    %41 = arith.sitofp %40 : vector<16x16xi32> to vector<16x16xf32>
    %cst_13 = arith.constant 5.000000e-01 : f32
    %42 = vector.broadcast %cst_13 : f32 to vector<16x16xf32>
    %43 = arith.addf %39, %42 : vector<16x16xf32>
    %cst_14 = arith.constant 1.250000e-01 : f32
    %44 = vector.broadcast %cst_14 : f32 to vector<16x16xf32>
    %45 = arith.mulf %43, %44 : vector<16x16xf32>
    %46 = math.floor %45 : vector<16x16xf32>
    %cst_15 = arith.constant 5.000000e-01 : f32
    %47 = vector.broadcast %cst_15 : f32 to vector<16x16xf32>
    %48 = arith.addf %41, %47 : vector<16x16xf32>
    %cst_16 = arith.constant 1.250000e-01 : f32
    %49 = vector.broadcast %cst_16 : f32 to vector<16x16xf32>
    %50 = arith.mulf %48, %49 : vector<16x16xf32>
    %51 = math.floor %50 : vector<16x16xf32>
    %52 = arith.cmpf oeq, %46, %51 : vector<16x16xf32>
    %c0_17 = arith.constant 0 : index
    %c0_18 = arith.constant 0 : index
    %53 = vector.load %arg2[%c0_17, %c0_18] : memref<1x16xf32, #tpu.memory_space<vmem>>, vector<1x16xf32>
    %cst_19 = arith.constant 5.000000e-01 : f32
    %54 = vector.broadcast %cst_19 : f32 to vector<1x16xf32>
    %55 = arith.cmpf ogt, %53, %54 : vector<1x16xf32>
    %56 = vector.broadcast %55 : vector<1x16xi1> to vector<16x16xi1>
    %57 = arith.andi %52, %56 : vector<16x16xi1>
    %cst_20 = arith.constant 0.000000e+00 : f32
    %cst_21 = arith.constant -1.000000e+09 : f32
    %58 = vector.broadcast %cst_20 : f32 to vector<16x16xf32>
    %59 = vector.broadcast %cst_21 : f32 to vector<16x16xf32>
    %60 = arith.select %57, %58, %59 : vector<16x16xi1>, vector<16x16xf32>
    %c0_22 = arith.constant 0 : index
    %c0_23 = arith.constant 0 : index
    %61 = vector.load %arg4[%c0_22, %c0_23] : memref<160x128xf32, #tpu.memory_space<vmem>>, vector<32x128xf32>
    %cst_24 = arith.constant dense<0.000000e+00> : vector<16x128xf32>
    %62 = tpu.matmul %37, %61, %cst_24 {dimension_numbers = #tpu.dot_dimension_numbers<[1], [0], [0], [1], [0, 0, 1, 1], [], []>} : vector<16x32xf32>, vector<32x128xf32>, vector<16x128xf32> -> vector<16x128xf32>
    %c8 = arith.constant 8 : index
    %c0_25 = arith.constant 0 : index
    %63 = vector.load %arg5[%c8, %c0_25] : memref<24x128xf32, #tpu.memory_space<vmem>>, vector<1x128xf32>
    %64 = vector.broadcast %63 : vector<1x128xf32> to vector<16x128xf32>
    %65 = arith.addf %62, %64 : vector<16x128xf32>
    %66 = vector.extract_strided_slice %65 {offsets = [0, 0], sizes = [16, 16], strides = [1, 1]} : vector<16x128xf32> to vector<16x16xf32>
    %67 = vector.extract_strided_slice %65 {offsets = [0, 32], sizes = [16, 16], strides = [1, 1]} : vector<16x128xf32> to vector<16x16xf32>
    %68 = vector.extract_strided_slice %65 {offsets = [0, 64], sizes = [16, 16], strides = [1, 1]} : vector<16x128xf32> to vector<16x16xf32>
    %69 = tpu.transpose %67, [1, 0] : vector<16x16xf32> -> vector<16x16xf32>
    %cst_26 = arith.constant dense<0.000000e+00> : vector<16x16xf32>
    %70 = tpu.matmul %66, %69, %cst_26 {dimension_numbers = #tpu.dot_dimension_numbers<[1], [0], [0], [1], [0, 0, 1, 1], [], []>} : vector<16x16xf32>, vector<16x16xf32>, vector<16x16xf32> -> vector<16x16xf32>
    %cst_27 = arith.constant 2.500000e-01 : f32
    %71 = vector.broadcast %cst_27 : f32 to vector<16x16xf32>
    %72 = arith.mulf %70, %71 : vector<16x16xf32>
    %73 = arith.addf %72, %60 : vector<16x16xf32>
    %cst_28 = arith.constant dense<0xFF800000> : vector<16xf32>
    %74 = vector.multi_reduction <maximumf>, %73, %cst_28 [1] : vector<16x16xf32> to vector<16xf32>
    %75 = vector.shape_cast %74 : vector<16xf32> to vector<16x1xf32>
    %76 = vector.broadcast %75 : vector<16x1xf32> to vector<16x16xf32>
    %77 = arith.subf %73, %76 : vector<16x16xf32>
    %78 = math.exp %77 : vector<16x16xf32>
    %cst_29 = arith.constant dense<0.000000e+00> : vector<16xf32>
    %79 = vector.multi_reduction <add>, %78, %cst_29 [1] : vector<16x16xf32> to vector<16xf32>
    %80 = vector.shape_cast %79 : vector<16xf32> to vector<16x1xf32>
    %81 = tpu.reciprocal %80 {approx = true} : vector<16x1xf32> -> vector<16x1xf32>
    %82 = vector.broadcast %81 : vector<16x1xf32> to vector<16x16xf32>
    %83 = arith.mulf %78, %82 : vector<16x16xf32>
    %cst_30 = arith.constant dense<0.000000e+00> : vector<16x16xf32>
    %84 = tpu.matmul %83, %68, %cst_30 {dimension_numbers = #tpu.dot_dimension_numbers<[1], [0], [0], [1], [0, 0, 1, 1], [], []>} : vector<16x16xf32>, vector<16x16xf32>, vector<16x16xf32> -> vector<16x16xf32>
    %85 = vector.extract_strided_slice %65 {offsets = [0, 16], sizes = [16, 16], strides = [1, 1]} : vector<16x128xf32> to vector<16x16xf32>
    %86 = vector.extract_strided_slice %65 {offsets = [0, 48], sizes = [16, 16], strides = [1, 1]} : vector<16x128xf32> to vector<16x16xf32>
    %87 = vector.extract_strided_slice %65 {offsets = [0, 80], sizes = [16, 16], strides = [1, 1]} : vector<16x128xf32> to vector<16x16xf32>
    %88 = tpu.transpose %86, [1, 0] : vector<16x16xf32> -> vector<16x16xf32>
    %cst_31 = arith.constant dense<0.000000e+00> : vector<16x16xf32>
    %89 = tpu.matmul %85, %88, %cst_31 {dimension_numbers = #tpu.dot_dimension_numbers<[1], [0], [0], [1], [0, 0, 1, 1], [], []>} : vector<16x16xf32>, vector<16x16xf32>, vector<16x16xf32> -> vector<16x16xf32>
    %cst_32 = arith.constant 2.500000e-01 : f32
    %90 = vector.broadcast %cst_32 : f32 to vector<16x16xf32>
    %91 = arith.mulf %89, %90 : vector<16x16xf32>
    %92 = arith.addf %91, %60 : vector<16x16xf32>
    %cst_33 = arith.constant dense<0xFF800000> : vector<16xf32>
    %93 = vector.multi_reduction <maximumf>, %92, %cst_33 [1] : vector<16x16xf32> to vector<16xf32>
    %94 = vector.shape_cast %93 : vector<16xf32> to vector<16x1xf32>
    %95 = vector.broadcast %94 : vector<16x1xf32> to vector<16x16xf32>
    %96 = arith.subf %92, %95 : vector<16x16xf32>
    %97 = math.exp %96 : vector<16x16xf32>
    %cst_34 = arith.constant dense<0.000000e+00> : vector<16xf32>
    %98 = vector.multi_reduction <add>, %97, %cst_34 [1] : vector<16x16xf32> to vector<16xf32>
    %99 = vector.shape_cast %98 : vector<16xf32> to vector<16x1xf32>
    %100 = tpu.reciprocal %99 {approx = true} : vector<16x1xf32> -> vector<16x1xf32>
    %101 = vector.broadcast %100 : vector<16x1xf32> to vector<16x16xf32>
    %102 = arith.mulf %97, %101 : vector<16x16xf32>
    %cst_35 = arith.constant dense<0.000000e+00> : vector<16x16xf32>
    %103 = tpu.matmul %102, %87, %cst_35 {dimension_numbers = #tpu.dot_dimension_numbers<[1], [0], [0], [1], [0, 0, 1, 1], [], []>} : vector<16x16xf32>, vector<16x16xf32>, vector<16x16xf32> -> vector<16x16xf32>
    %104 = tpu.concatenate %84, %103 in 1 : vector<16x16xf32>, vector<16x16xf32> -> vector<16x32xf32>
    %c176 = arith.constant 176 : index
    %c0_36 = arith.constant 0 : index
    %105 = vector.load %arg3[%c176, %c0_36] : memref<496x32xf32, #tpu.memory_space<vmem>>, vector<32x32xf32>
    %cst_37 = arith.constant dense<0.000000e+00> : vector<16x32xf32>
    %106 = tpu.matmul %104, %105, %cst_37 {dimension_numbers = #tpu.dot_dimension_numbers<[1], [0], [0], [1], [0, 0, 1, 1], [], []>} : vector<16x32xf32>, vector<32x32xf32>, vector<16x32xf32> -> vector<16x32xf32>
    %c9 = arith.constant 9 : index
    %c0_38 = arith.constant 0 : index
    %107 = vector.load %arg5[%c9, %c0_38] : memref<24x128xf32, #tpu.memory_space<vmem>>, vector<1x32xf32>
    %108 = vector.broadcast %107 : vector<1x32xf32> to vector<16x32xf32>
    %109 = arith.addf %106, %108 : vector<16x32xf32>
    %110 = arith.addf %37, %109 : vector<16x32xf32>
    %c10 = arith.constant 10 : index
    %c0_39 = arith.constant 0 : index
    %111 = vector.load %arg5[%c10, %c0_39] : memref<24x128xf32, #tpu.memory_space<vmem>>, vector<1x32xf32>
    %c11 = arith.constant 11 : index
    %c0_40 = arith.constant 0 : index
    %112 = vector.load %arg5[%c11, %c0_40] : memref<24x128xf32, #tpu.memory_space<vmem>>, vector<1x32xf32>
    %cst_41 = arith.constant dense<0.000000e+00> : vector<16xf32>
    %113 = vector.multi_reduction <add>, %110, %cst_41 [1] : vector<16x32xf32> to vector<16xf32>
    %114 = vector.shape_cast %113 : vector<16xf32> to vector<16x1xf32>
    %cst_42 = arith.constant 3.200000e+01 : f32
    %115 = vector.broadcast %cst_42 : f32 to vector<16x1xf32>
    %116 = arith.divf %114, %115 : vector<16x1xf32>
    %117 = vector.broadcast %116 : vector<16x1xf32> to vector<16x32xf32>
    %118 = arith.subf %110, %117 : vector<16x32xf32>
    %119 = arith.mulf %118, %118 : vector<16x32xf32>
    %cst_43 = arith.constant dense<0.000000e+00> : vector<16xf32>
    %120 = vector.multi_reduction <add>, %119, %cst_43 [1] : vector<16x32xf32> to vector<16xf32>
    %121 = vector.shape_cast %120 : vector<16xf32> to vector<16x1xf32>
    %cst_44 = arith.constant 3.200000e+01 : f32
    %122 = vector.broadcast %cst_44 : f32 to vector<16x1xf32>
    %123 = arith.divf %121, %122 : vector<16x1xf32>
    %124 = vector.broadcast %116 : vector<16x1xf32> to vector<16x32xf32>
    %125 = arith.subf %110, %124 : vector<16x32xf32>
    %cst_45 = arith.constant 9.99999996E-13 : f32
    %126 = vector.broadcast %cst_45 : f32 to vector<16x1xf32>
    %127 = arith.addf %123, %126 : vector<16x1xf32>
    %128 = math.rsqrt %127 : vector<16x1xf32>
    %129 = vector.broadcast %128 : vector<16x1xf32> to vector<16x32xf32>
    %130 = arith.mulf %125, %129 : vector<16x32xf32>
    %131 = vector.broadcast %111 : vector<1x32xf32> to vector<16x32xf32>
    %132 = arith.mulf %130, %131 : vector<16x32xf32>
    %133 = vector.broadcast %112 : vector<1x32xf32> to vector<16x32xf32>
    %134 = arith.addf %132, %133 : vector<16x32xf32>
    %c32 = arith.constant 32 : index
    %c0_46 = arith.constant 0 : index
    %135 = vector.load %arg4[%c32, %c0_46] : memref<160x128xf32, #tpu.memory_space<vmem>>, vector<32x128xf32>
    %cst_47 = arith.constant dense<0.000000e+00> : vector<16x128xf32>
    %136 = tpu.matmul %134, %135, %cst_47 {dimension_numbers = #tpu.dot_dimension_numbers<[1], [0], [0], [1], [0, 0, 1, 1], [], []>} : vector<16x32xf32>, vector<32x128xf32>, vector<16x128xf32> -> vector<16x128xf32>
    %c12 = arith.constant 12 : index
    %c0_48 = arith.constant 0 : index
    %137 = vector.load %arg5[%c12, %c0_48] : memref<24x128xf32, #tpu.memory_space<vmem>>, vector<1x128xf32>
    %138 = vector.broadcast %137 : vector<1x128xf32> to vector<16x128xf32>
    %139 = arith.addf %136, %138 : vector<16x128xf32>
    %cst_49 = arith.constant 5.000000e-01 : f32
    %140 = vector.broadcast %cst_49 : f32 to vector<16x128xf32>
    %141 = arith.mulf %140, %139 : vector<16x128xf32>
    %cst_50 = arith.constant 4.471500e-02 : f32
    %142 = vector.broadcast %cst_50 : f32 to vector<16x128xf32>
    %143 = arith.mulf %142, %139 : vector<16x128xf32>
    %144 = arith.mulf %143, %139 : vector<16x128xf32>
    %145 = arith.mulf %144, %139 : vector<16x128xf32>
    %146 = arith.addf %139, %145 : vector<16x128xf32>
    %cst_51 = arith.constant 0.797884583 : f32
    %147 = vector.broadcast %cst_51 : f32 to vector<16x128xf32>
    %148 = arith.mulf %147, %146 : vector<16x128xf32>
    %149 = math.tanh %148 : vector<16x128xf32>
    %cst_52 = arith.constant 1.000000e+00 : f32
    %150 = vector.broadcast %cst_52 : f32 to vector<16x128xf32>
    %151 = arith.addf %150, %149 : vector<16x128xf32>
    %152 = arith.mulf %141, %151 : vector<16x128xf32>
    %c208 = arith.constant 208 : index
    %c0_53 = arith.constant 0 : index
    %153 = vector.load %arg3[%c208, %c0_53] : memref<496x32xf32, #tpu.memory_space<vmem>>, vector<128x32xf32>
    %cst_54 = arith.constant dense<0.000000e+00> : vector<16x32xf32>
    %154 = tpu.matmul %152, %153, %cst_54 {dimension_numbers = #tpu.dot_dimension_numbers<[1], [0], [0], [1], [0, 0, 1, 1], [], []>} : vector<16x128xf32>, vector<128x32xf32>, vector<16x32xf32> -> vector<16x32xf32>
    %c13 = arith.constant 13 : index
    %c0_55 = arith.constant 0 : index
    %155 = vector.load %arg5[%c13, %c0_55] : memref<24x128xf32, #tpu.memory_space<vmem>>, vector<1x32xf32>
    %156 = vector.broadcast %155 : vector<1x32xf32> to vector<16x32xf32>
    %157 = arith.addf %154, %156 : vector<16x32xf32>
    %158 = arith.addf %134, %157 : vector<16x32xf32>
    %c14 = arith.constant 14 : index
    %c0_56 = arith.constant 0 : index
    %159 = vector.load %arg5[%c14, %c0_56] : memref<24x128xf32, #tpu.memory_space<vmem>>, vector<1x32xf32>
    %c15 = arith.constant 15 : index
    %c0_57 = arith.constant 0 : index
    %160 = vector.load %arg5[%c15, %c0_57] : memref<24x128xf32, #tpu.memory_space<vmem>>, vector<1x32xf32>
    %cst_58 = arith.constant dense<0.000000e+00> : vector<16xf32>
    %161 = vector.multi_reduction <add>, %158, %cst_58 [1] : vector<16x32xf32> to vector<16xf32>
    %162 = vector.shape_cast %161 : vector<16xf32> to vector<16x1xf32>
    %cst_59 = arith.constant 3.200000e+01 : f32
    %163 = vector.broadcast %cst_59 : f32 to vector<16x1xf32>
    %164 = arith.divf %162, %163 : vector<16x1xf32>
    %165 = vector.broadcast %164 : vector<16x1xf32> to vector<16x32xf32>
    %166 = arith.subf %158, %165 : vector<16x32xf32>
    %167 = arith.mulf %166, %166 : vector<16x32xf32>
    %cst_60 = arith.constant dense<0.000000e+00> : vector<16xf32>
    %168 = vector.multi_reduction <add>, %167, %cst_60 [1] : vector<16x32xf32> to vector<16xf32>
    %169 = vector.shape_cast %168 : vector<16xf32> to vector<16x1xf32>
    %cst_61 = arith.constant 3.200000e+01 : f32
    %170 = vector.broadcast %cst_61 : f32 to vector<16x1xf32>
    %171 = arith.divf %169, %170 : vector<16x1xf32>
    %172 = vector.broadcast %164 : vector<16x1xf32> to vector<16x32xf32>
    %173 = arith.subf %158, %172 : vector<16x32xf32>
    %cst_62 = arith.constant 9.99999996E-13 : f32
    %174 = vector.broadcast %cst_62 : f32 to vector<16x1xf32>
    %175 = arith.addf %171, %174 : vector<16x1xf32>
    %176 = math.rsqrt %175 : vector<16x1xf32>
    %177 = vector.broadcast %176 : vector<16x1xf32> to vector<16x32xf32>
    %178 = arith.mulf %173, %177 : vector<16x32xf32>
    %179 = vector.broadcast %159 : vector<1x32xf32> to vector<16x32xf32>
    %180 = arith.mulf %178, %179 : vector<16x32xf32>
    %181 = vector.broadcast %160 : vector<1x32xf32> to vector<16x32xf32>
    %182 = arith.addf %180, %181 : vector<16x32xf32>
    %c64 = arith.constant 64 : index
    %c0_63 = arith.constant 0 : index
    %183 = vector.load %arg4[%c64, %c0_63] : memref<160x128xf32, #tpu.memory_space<vmem>>, vector<32x128xf32>
    %cst_64 = arith.constant dense<0.000000e+00> : vector<16x128xf32>
    %184 = tpu.matmul %182, %183, %cst_64 {dimension_numbers = #tpu.dot_dimension_numbers<[1], [0], [0], [1], [0, 0, 1, 1], [], []>} : vector<16x32xf32>, vector<32x128xf32>, vector<16x128xf32> -> vector<16x128xf32>
    %c16 = arith.constant 16 : index
    %c0_65 = arith.constant 0 : index
    %185 = vector.load %arg5[%c16, %c0_65] : memref<24x128xf32, #tpu.memory_space<vmem>>, vector<1x128xf32>
    %186 = vector.broadcast %185 : vector<1x128xf32> to vector<16x128xf32>
    %187 = arith.addf %184, %186 : vector<16x128xf32>
    %188 = vector.extract_strided_slice %187 {offsets = [0, 0], sizes = [16, 16], strides = [1, 1]} : vector<16x128xf32> to vector<16x16xf32>
    %189 = vector.extract_strided_slice %187 {offsets = [0, 32], sizes = [16, 16], strides = [1, 1]} : vector<16x128xf32> to vector<16x16xf32>
    %190 = vector.extract_strided_slice %187 {offsets = [0, 64], sizes = [16, 16], strides = [1, 1]} : vector<16x128xf32> to vector<16x16xf32>
    %191 = tpu.transpose %189, [1, 0] : vector<16x16xf32> -> vector<16x16xf32>
    %cst_66 = arith.constant dense<0.000000e+00> : vector<16x16xf32>
    %192 = tpu.matmul %188, %191, %cst_66 {dimension_numbers = #tpu.dot_dimension_numbers<[1], [0], [0], [1], [0, 0, 1, 1], [], []>} : vector<16x16xf32>, vector<16x16xf32>, vector<16x16xf32> -> vector<16x16xf32>
    %cst_67 = arith.constant 2.500000e-01 : f32
    %193 = vector.broadcast %cst_67 : f32 to vector<16x16xf32>
    %194 = arith.mulf %192, %193 : vector<16x16xf32>
    %195 = arith.addf %194, %60 : vector<16x16xf32>
    %cst_68 = arith.constant dense<0xFF800000> : vector<16xf32>
    %196 = vector.multi_reduction <maximumf>, %195, %cst_68 [1] : vector<16x16xf32> to vector<16xf32>
    %197 = vector.shape_cast %196 : vector<16xf32> to vector<16x1xf32>
    %198 = vector.broadcast %197 : vector<16x1xf32> to vector<16x16xf32>
    %199 = arith.subf %195, %198 : vector<16x16xf32>
    %200 = math.exp %199 : vector<16x16xf32>
    %cst_69 = arith.constant dense<0.000000e+00> : vector<16xf32>
    %201 = vector.multi_reduction <add>, %200, %cst_69 [1] : vector<16x16xf32> to vector<16xf32>
    %202 = vector.shape_cast %201 : vector<16xf32> to vector<16x1xf32>
    %203 = tpu.reciprocal %202 {approx = true} : vector<16x1xf32> -> vector<16x1xf32>
    %204 = vector.broadcast %203 : vector<16x1xf32> to vector<16x16xf32>
    %205 = arith.mulf %200, %204 : vector<16x16xf32>
    %cst_70 = arith.constant dense<0.000000e+00> : vector<16x16xf32>
    %206 = tpu.matmul %205, %190, %cst_70 {dimension_numbers = #tpu.dot_dimension_numbers<[1], [0], [0], [1], [0, 0, 1, 1], [], []>} : vector<16x16xf32>, vector<16x16xf32>, vector<16x16xf32> -> vector<16x16xf32>
    %207 = vector.extract_strided_slice %187 {offsets = [0, 16], sizes = [16, 16], strides = [1, 1]} : vector<16x128xf32> to vector<16x16xf32>
    %208 = vector.extract_strided_slice %187 {offsets = [0, 48], sizes = [16, 16], strides = [1, 1]} : vector<16x128xf32> to vector<16x16xf32>
    %209 = vector.extract_strided_slice %187 {offsets = [0, 80], sizes = [16, 16], strides = [1, 1]} : vector<16x128xf32> to vector<16x16xf32>
    %210 = tpu.transpose %208, [1, 0] : vector<16x16xf32> -> vector<16x16xf32>
    %cst_71 = arith.constant dense<0.000000e+00> : vector<16x16xf32>
    %211 = tpu.matmul %207, %210, %cst_71 {dimension_numbers = #tpu.dot_dimension_numbers<[1], [0], [0], [1], [0, 0, 1, 1], [], []>} : vector<16x16xf32>, vector<16x16xf32>, vector<16x16xf32> -> vector<16x16xf32>
    %cst_72 = arith.constant 2.500000e-01 : f32
    %212 = vector.broadcast %cst_72 : f32 to vector<16x16xf32>
    %213 = arith.mulf %211, %212 : vector<16x16xf32>
    %214 = arith.addf %213, %60 : vector<16x16xf32>
    %cst_73 = arith.constant dense<0xFF800000> : vector<16xf32>
    %215 = vector.multi_reduction <maximumf>, %214, %cst_73 [1] : vector<16x16xf32> to vector<16xf32>
    %216 = vector.shape_cast %215 : vector<16xf32> to vector<16x1xf32>
    %217 = vector.broadcast %216 : vector<16x1xf32> to vector<16x16xf32>
    %218 = arith.subf %214, %217 : vector<16x16xf32>
    %219 = math.exp %218 : vector<16x16xf32>
    %cst_74 = arith.constant dense<0.000000e+00> : vector<16xf32>
    %220 = vector.multi_reduction <add>, %219, %cst_74 [1] : vector<16x16xf32> to vector<16xf32>
    %221 = vector.shape_cast %220 : vector<16xf32> to vector<16x1xf32>
    %222 = tpu.reciprocal %221 {approx = true} : vector<16x1xf32> -> vector<16x1xf32>
    %223 = vector.broadcast %222 : vector<16x1xf32> to vector<16x16xf32>
    %224 = arith.mulf %219, %223 : vector<16x16xf32>
    %cst_75 = arith.constant dense<0.000000e+00> : vector<16x16xf32>
    %225 = tpu.matmul %224, %209, %cst_75 {dimension_numbers = #tpu.dot_dimension_numbers<[1], [0], [0], [1], [0, 0, 1, 1], [], []>} : vector<16x16xf32>, vector<16x16xf32>, vector<16x16xf32> -> vector<16x16xf32>
    %226 = tpu.concatenate %206, %225 in 1 : vector<16x16xf32>, vector<16x16xf32> -> vector<16x32xf32>
    %c336 = arith.constant 336 : index
    %c0_76 = arith.constant 0 : index
    %227 = vector.load %arg3[%c336, %c0_76] : memref<496x32xf32, #tpu.memory_space<vmem>>, vector<32x32xf32>
    %cst_77 = arith.constant dense<0.000000e+00> : vector<16x32xf32>
    %228 = tpu.matmul %226, %227, %cst_77 {dimension_numbers = #tpu.dot_dimension_numbers<[1], [0], [0], [1], [0, 0, 1, 1], [], []>} : vector<16x32xf32>, vector<32x32xf32>, vector<16x32xf32> -> vector<16x32xf32>
    %c17 = arith.constant 17 : index
    %c0_78 = arith.constant 0 : index
    %229 = vector.load %arg5[%c17, %c0_78] : memref<24x128xf32, #tpu.memory_space<vmem>>, vector<1x32xf32>
    %230 = vector.broadcast %229 : vector<1x32xf32> to vector<16x32xf32>
    %231 = arith.addf %228, %230 : vector<16x32xf32>
    %232 = arith.addf %182, %231 : vector<16x32xf32>
    %c18 = arith.constant 18 : index
    %c0_79 = arith.constant 0 : index
    %233 = vector.load %arg5[%c18, %c0_79] : memref<24x128xf32, #tpu.memory_space<vmem>>, vector<1x32xf32>
    %c19 = arith.constant 19 : index
    %c0_80 = arith.constant 0 : index
    %234 = vector.load %arg5[%c19, %c0_80] : memref<24x128xf32, #tpu.memory_space<vmem>>, vector<1x32xf32>
    %cst_81 = arith.constant dense<0.000000e+00> : vector<16xf32>
    %235 = vector.multi_reduction <add>, %232, %cst_81 [1] : vector<16x32xf32> to vector<16xf32>
    %236 = vector.shape_cast %235 : vector<16xf32> to vector<16x1xf32>
    %cst_82 = arith.constant 3.200000e+01 : f32
    %237 = vector.broadcast %cst_82 : f32 to vector<16x1xf32>
    %238 = arith.divf %236, %237 : vector<16x1xf32>
    %239 = vector.broadcast %238 : vector<16x1xf32> to vector<16x32xf32>
    %240 = arith.subf %232, %239 : vector<16x32xf32>
    %241 = arith.mulf %240, %240 : vector<16x32xf32>
    %cst_83 = arith.constant dense<0.000000e+00> : vector<16xf32>
    %242 = vector.multi_reduction <add>, %241, %cst_83 [1] : vector<16x32xf32> to vector<16xf32>
    %243 = vector.shape_cast %242 : vector<16xf32> to vector<16x1xf32>
    %cst_84 = arith.constant 3.200000e+01 : f32
    %244 = vector.broadcast %cst_84 : f32 to vector<16x1xf32>
    %245 = arith.divf %243, %244 : vector<16x1xf32>
    %246 = vector.broadcast %238 : vector<16x1xf32> to vector<16x32xf32>
    %247 = arith.subf %232, %246 : vector<16x32xf32>
    %cst_85 = arith.constant 9.99999996E-13 : f32
    %248 = vector.broadcast %cst_85 : f32 to vector<16x1xf32>
    %249 = arith.addf %245, %248 : vector<16x1xf32>
    %250 = math.rsqrt %249 : vector<16x1xf32>
    %251 = vector.broadcast %250 : vector<16x1xf32> to vector<16x32xf32>
    %252 = arith.mulf %247, %251 : vector<16x32xf32>
    %253 = vector.broadcast %233 : vector<1x32xf32> to vector<16x32xf32>
    %254 = arith.mulf %252, %253 : vector<16x32xf32>
    %255 = vector.broadcast %234 : vector<1x32xf32> to vector<16x32xf32>
    %256 = arith.addf %254, %255 : vector<16x32xf32>
    %c96 = arith.constant 96 : index
    %c0_86 = arith.constant 0 : index
    %257 = vector.load %arg4[%c96, %c0_86] : memref<160x128xf32, #tpu.memory_space<vmem>>, vector<32x128xf32>
    %cst_87 = arith.constant dense<0.000000e+00> : vector<16x128xf32>
    %258 = tpu.matmul %256, %257, %cst_87 {dimension_numbers = #tpu.dot_dimension_numbers<[1], [0], [0], [1], [0, 0, 1, 1], [], []>} : vector<16x32xf32>, vector<32x128xf32>, vector<16x128xf32> -> vector<16x128xf32>
    %c20 = arith.constant 20 : index
    %c0_88 = arith.constant 0 : index
    %259 = vector.load %arg5[%c20, %c0_88] : memref<24x128xf32, #tpu.memory_space<vmem>>, vector<1x128xf32>
    %260 = vector.broadcast %259 : vector<1x128xf32> to vector<16x128xf32>
    %261 = arith.addf %258, %260 : vector<16x128xf32>
    %cst_89 = arith.constant 5.000000e-01 : f32
    %262 = vector.broadcast %cst_89 : f32 to vector<16x128xf32>
    %263 = arith.mulf %262, %261 : vector<16x128xf32>
    %cst_90 = arith.constant 4.471500e-02 : f32
    %264 = vector.broadcast %cst_90 : f32 to vector<16x128xf32>
    %265 = arith.mulf %264, %261 : vector<16x128xf32>
    %266 = arith.mulf %265, %261 : vector<16x128xf32>
    %267 = arith.mulf %266, %261 : vector<16x128xf32>
    %268 = arith.addf %261, %267 : vector<16x128xf32>
    %cst_91 = arith.constant 0.797884583 : f32
    %269 = vector.broadcast %cst_91 : f32 to vector<16x128xf32>
    %270 = arith.mulf %269, %268 : vector<16x128xf32>
    %271 = math.tanh %270 : vector<16x128xf32>
    %cst_92 = arith.constant 1.000000e+00 : f32
    %272 = vector.broadcast %cst_92 : f32 to vector<16x128xf32>
    %273 = arith.addf %272, %271 : vector<16x128xf32>
    %274 = arith.mulf %263, %273 : vector<16x128xf32>
    %c368 = arith.constant 368 : index
    %c0_93 = arith.constant 0 : index
    %275 = vector.load %arg3[%c368, %c0_93] : memref<496x32xf32, #tpu.memory_space<vmem>>, vector<128x32xf32>
    %cst_94 = arith.constant dense<0.000000e+00> : vector<16x32xf32>
    %276 = tpu.matmul %274, %275, %cst_94 {dimension_numbers = #tpu.dot_dimension_numbers<[1], [0], [0], [1], [0, 0, 1, 1], [], []>} : vector<16x128xf32>, vector<128x32xf32>, vector<16x32xf32> -> vector<16x32xf32>
    %c21 = arith.constant 21 : index
    %c0_95 = arith.constant 0 : index
    %277 = vector.load %arg5[%c21, %c0_95] : memref<24x128xf32, #tpu.memory_space<vmem>>, vector<1x32xf32>
    %278 = vector.broadcast %277 : vector<1x32xf32> to vector<16x32xf32>
    %279 = arith.addf %276, %278 : vector<16x32xf32>
    %280 = arith.addf %256, %279 : vector<16x32xf32>
    %c22 = arith.constant 22 : index
    %c0_96 = arith.constant 0 : index
    %281 = vector.load %arg5[%c22, %c0_96] : memref<24x128xf32, #tpu.memory_space<vmem>>, vector<1x32xf32>
    %c23 = arith.constant 23 : index
    %c0_97 = arith.constant 0 : index
    %282 = vector.load %arg5[%c23, %c0_97] : memref<24x128xf32, #tpu.memory_space<vmem>>, vector<1x32xf32>
    %cst_98 = arith.constant dense<0.000000e+00> : vector<16xf32>
    %283 = vector.multi_reduction <add>, %280, %cst_98 [1] : vector<16x32xf32> to vector<16xf32>
    %284 = vector.shape_cast %283 : vector<16xf32> to vector<16x1xf32>
    %cst_99 = arith.constant 3.200000e+01 : f32
    %285 = vector.broadcast %cst_99 : f32 to vector<16x1xf32>
    %286 = arith.divf %284, %285 : vector<16x1xf32>
    %287 = vector.broadcast %286 : vector<16x1xf32> to vector<16x32xf32>
    %288 = arith.subf %280, %287 : vector<16x32xf32>
    %289 = arith.mulf %288, %288 : vector<16x32xf32>
    %cst_100 = arith.constant dense<0.000000e+00> : vector<16xf32>
    %290 = vector.multi_reduction <add>, %289, %cst_100 [1] : vector<16x32xf32> to vector<16xf32>
    %291 = vector.shape_cast %290 : vector<16xf32> to vector<16x1xf32>
    %cst_101 = arith.constant 3.200000e+01 : f32
    %292 = vector.broadcast %cst_101 : f32 to vector<16x1xf32>
    %293 = arith.divf %291, %292 : vector<16x1xf32>
    %294 = vector.broadcast %286 : vector<16x1xf32> to vector<16x32xf32>
    %295 = arith.subf %280, %294 : vector<16x32xf32>
    %cst_102 = arith.constant 9.99999996E-13 : f32
    %296 = vector.broadcast %cst_102 : f32 to vector<16x1xf32>
    %297 = arith.addf %293, %296 : vector<16x1xf32>
    %298 = math.rsqrt %297 : vector<16x1xf32>
    %299 = vector.broadcast %298 : vector<16x1xf32> to vector<16x32xf32>
    %300 = arith.mulf %295, %299 : vector<16x32xf32>
    %301 = vector.broadcast %281 : vector<1x32xf32> to vector<16x32xf32>
    %302 = arith.mulf %300, %301 : vector<16x32xf32>
    %303 = vector.broadcast %282 : vector<1x32xf32> to vector<16x32xf32>
    %304 = arith.addf %302, %303 : vector<16x32xf32>
    %c144 = arith.constant 144 : index
    %c0_103 = arith.constant 0 : index
    %305 = vector.load %arg3[%c144, %c0_103] : memref<496x32xf32, #tpu.memory_space<vmem>>, vector<32x32xf32>
    %cst_104 = arith.constant dense<0.000000e+00> : vector<16x32xf32>
    %306 = tpu.matmul %304, %305, %cst_104 {dimension_numbers = #tpu.dot_dimension_numbers<[1], [0], [0], [1], [0, 0, 1, 1], [], []>} : vector<16x32xf32>, vector<32x32xf32>, vector<16x32xf32> -> vector<16x32xf32>
    %c3 = arith.constant 3 : index
    %c0_105 = arith.constant 0 : index
    %307 = vector.load %arg5[%c3, %c0_105] : memref<24x128xf32, #tpu.memory_space<vmem>>, vector<1x32xf32>
    %308 = vector.broadcast %307 : vector<1x32xf32> to vector<16x32xf32>
    %309 = arith.addf %306, %308 : vector<16x32xf32>
    %cst_106 = arith.constant 0.000000e+00 : f32
    %310 = vector.broadcast %cst_106 : f32 to vector<16x32xf32>
    %311 = arith.maximumf %309, %310 : vector<16x32xf32>
    %c128_107 = arith.constant 128 : index
    %c0_108 = arith.constant 0 : index
    %312 = vector.load %arg4[%c128_107, %c0_108] : memref<160x128xf32, #tpu.memory_space<vmem>>, vector<32x128xf32>
    %cst_109 = arith.constant dense<0.000000e+00> : vector<16x128xf32>
    %313 = tpu.matmul %311, %312, %cst_109 {dimension_numbers = #tpu.dot_dimension_numbers<[1], [0], [0], [1], [0, 0, 1, 1], [], []>} : vector<16x32xf32>, vector<32x128xf32>, vector<16x128xf32> -> vector<16x128xf32>
    %c4 = arith.constant 4 : index
    %c0_110 = arith.constant 0 : index
    %314 = vector.load %arg5[%c4, %c0_110] : memref<24x128xf32, #tpu.memory_space<vmem>>, vector<1x128xf32>
    %315 = vector.broadcast %314 : vector<1x128xf32> to vector<16x128xf32>
    %316 = arith.addf %313, %315 : vector<16x128xf32>
    %c0_111 = arith.constant 0 : index
    %c0_112 = arith.constant 0 : index
    %317 = vector.load %arg6[%c0_111, %c0_112] : memref<16x128xf32, #tpu.memory_space<vmem>>, vector<16x128xf32>
    tpu.vector_store %arg6[%c0_111, %c0_112], %316 {strides = array<i32>} : memref<16x128xf32, #tpu.memory_space<vmem>>, vector<16x128xf32>,
    return
  }
  func.func @transform_0(%arg0: i32) -> (i32, i32) {
    %c0_i32 = arith.constant 0 : i32
    %c0_i32_0 = arith.constant 0 : i32
    %c0_i32_1 = arith.constant 0 : i32
    return %c0_i32, %c0_i32_0 : i32, i32
  }
  func.func @transform_1(%arg0: i32) -> (i32, i32) {
    %c0_i32 = arith.constant 0 : i32
    %c0_i32_0 = arith.constant 0 : i32
    %c0_i32_1 = arith.constant 0 : i32
    return %c0_i32, %c0_i32_0 : i32, i32
  }
  func.func @transform_2(%arg0: i32) -> (i32, i32) {
    %c0_i32 = arith.constant 0 : i32
    %c0_i32_0 = arith.constant 0 : i32
    %c0_i32_1 = arith.constant 0 : i32
    return %c0_i32, %c0_i32_0 : i32, i32
  }
  func.func @transform_3(%arg0: i32) -> (i32, i32) {
    %c0_i32 = arith.constant 0 : i32
    %c0_i32_0 = arith.constant 0 : i32
    %c0_i32_1 = arith.constant 0 : i32
    return %c0_i32, %c0_i32_0 : i32, i32
  }
  func.func @transform_4(%arg0: i32) -> (i32, i32) {
    %c0_i32 = arith.constant 0 : i32
    %c0_i32_0 = arith.constant 0 : i32
    %c0_i32_1 = arith.constant 0 : i32
    return %c0_i32, %c0_i32_0 : i32, i32
  }
  func.func @transform_5(%arg0: i32) -> (i32, i32) {
    %c0_i32 = arith.constant 0 : i32
    %c0_i32_0 = arith.constant 0 : i32
    %c0_i32_1 = arith.constant 0 : i32
    return %c0_i32, %c0_i32_0 : i32, i32
  }
}

</mosaic_0001>

<llo_original>
// kernel: forward.1
$region0: #{forward.1}
  #allocation0 [shape = 'u32[]', space=smem, size = 0x4, offset = 0x4, fixed_abs, tag = 'smem constant byte address 0x4 - core index']
  #allocation1 [shape = 'u32[144,128]{1,0:T(1,128)}', space=vmem, size = 0x12000, scoped, tag = 'internal scratch']
  %s0 = inlined_call_operand.vmem [shape: s32[16,1], index: 0, kind: input, shape index: {}]
  %s1 = inlined_call_operand.vmem [shape: f32[1,16], index: 1, kind: input, shape index: {}]
  %s2 = inlined_call_operand.vmem [shape: f32[496,32], index: 2, kind: input, shape index: {}]
  %s3 = inlined_call_operand.vmem [shape: f32[160,128], index: 3, kind: input, shape index: {}]
  %s4 = inlined_call_operand.vmem [shape: f32[24,128], index: 4, kind: input, shape index: {}]
  %s5 = inlined_call_operand.vmem [shape: f32[16,128], index: 5, kind: output, shape index: {}]
  %s6 = sld [smem:[#allocation0]]
  $region30: #{forward.1} parent=0
    _
  %s8 = ssub.s32 1, %s6
  %s9 = scalar_select 0, %s8, %s6
  // Predicated region
  $region2: #{forward.1} parent=0 // pred_check
    _
  $region3: #{forward.1} parent=0 // pred_check_branch
    %11 = sbr.rel (0) target = $region5
  $region4: #{forward.1} parent=0 // pred_region
    _
  $region5: #{forward.1} parent=0 // pred_fallthru
    _
  // Predicated region
  $region6: #{forward.1} parent=0 // pred_check
    _
  $region7: #{forward.1} parent=0 // pred_check_branch
    %13 = sbr.rel (0) target = $region9
  $region8: #{forward.1} parent=0 // pred_region
    _
  $region9: #{forward.1} parent=0 // pred_fallthru
    _
  // Predicated region
  $region10: #{forward.1} parent=0 // pred_check
    _
  $region11: #{forward.1} parent=0 // pred_check_branch
    %15 = sbr.rel (0) target = $region13
  $region12: #{forward.1} parent=0 // pred_region
    _
  $region13: #{forward.1} parent=0 // pred_fallthru
    _
  // Predicated region
  $region14: #{forward.1} parent=0 // pred_check
    _
  $region15: #{forward.1} parent=0 // pred_check_branch
    %17 = sbr.rel (0) target = $region17
  $region16: #{forward.1} parent=0 // pred_region
    _
  $region17: #{forward.1} parent=0 // pred_fallthru
    _
  // Predicated region
  $region18: #{forward.1} parent=0 // pred_check
    _
  $region19: #{forward.1} parent=0 // pred_check_branch
    %19 = sbr.rel (0) target = $region21
  $region20: #{forward.1} parent=0 // pred_region
    _
  $region21: #{forward.1} parent=0 // pred_fallthru
    _
  %v20 = vld [vmem:[%s0] sm:$0xff]
  %v21 = vld [vmem:[%s0 + $0x8] sm:$0xff]
  %v22 = vlaneseq
  %v23 = vand.u32 %v22, 127
  %24 = vset.pattern.permute.xlu0 0
  %25 = vperm.xlu0 %24, %v20
  %v26 = vpop.permute.xlu0 %25
  %27 = vset.pattern.permute.xlu0 0
  %28 = vperm.xlu0 %27, %v21
  %v29 = vpop.permute.xlu0 %28
  %vm30 = vcmp.eq.s32.totalorder %v23, %v26
  %vm31 = vcmp.eq.s32.totalorder %v23, %v29
  %v32 = vsel %vm30, 1, 0
  %v33 = vsel %vm31, 1, 0
  %v34 = vcvt.s32.f32 %v32
  %v35 = vcvt.s32.f32 %v33
  %v36 = vld [vmem:[%s2] sm:$0xff]
  %v37 = vld [vmem:[%s2 + $0x8] sm:$0xff]
  %v38 = vld [vmem:[%s2 + $0x10] sm:$0xff]
  %v39 = vld [vmem:[%s2 + $0x18] sm:$0xff]
  %v40 = vld [vmem:[%s2 + $0x20] sm:$0xff]
  %v41 = vld [vmem:[%s2 + $0x28] sm:$0xff]
  %v42 = vld [vmem:[%s2 + $0x30] sm:$0xff]
  %v43 = vld [vmem:[%s2 + $0x38] sm:$0xff]
  %v44 = vld [vmem:[%s2 + $0x40] sm:$0xff]
  %v45 = vld [vmem:[%s2 + $0x48] sm:$0xff]
  %v46 = vld [vmem:[%s2 + $0x50] sm:$0xff]
  %v47 = vld [vmem:[%s2 + $0x58] sm:$0xff]
  %v48 = vld [vmem:[%s2 + $0x60] sm:$0xff]
  %v49 = vld [vmem:[%s2 + $0x68] sm:$0xff]
  %v50 = vld [vmem:[%s2 + $0x70] sm:$0xff]
  %v51 = vld [vmem:[%s2 + $0x78] sm:$0xff]
  %v52 = vld [vmem:[%s2 + $0x80] sm:$0xff]
  %53 = vmatprep.subr.mxu0 0.0
  %54 = vmatpush1.msra.mxu0 %v36
  %55 = vmatprep.subr.mxu0 0.0
  %56 = vmatpush1.msra.mxu0 %v37
  %57 = vmatprep.subr.mxu0 0.0
  %58 = vmatpush1.msra.mxu0 %v38
  %59 = vmatprep.subr.mxu0 0.0
  %60 = vmatpush1.msra.mxu0 %v39
  %61 = vmatprep.subr.mxu0 0.0
  %62 = vmatpush1.msra.mxu0 %v40
  %63 = vmatprep.subr.mxu0 0.0
  %64 = vmatpush1.msra.mxu0 %v41
  %65 = vmatprep.subr.mxu0 0.0
  %66 = vmatpush1.msra.mxu0 %v42
  %67 = vmatprep.subr.mxu0 0.0
  %68 = vmatpush1.msra.mxu0 %v43
  %69 = vmatprep.subr.mxu0 0.0
  %70 = vmatpush1.msra.mxu0 %v44
  %71 = vmatprep.subr.mxu0 0.0
  %72 = vmatpush1.msra.mxu0 %v45
  %73 = vmatprep.subr.mxu0 0.0
  %74 = vmatpush1.msra.mxu0 %v46
  %75 = vmatprep.subr.mxu0 0.0
  %76 = vmatpush1.msra.mxu0 %v47
  %77 = vmatprep.subr.mxu0 0.0
  %78 = vmatpush1.msra.mxu0 %v48
  %79 = vmatprep.subr.mxu0 0.0
  %80 = vmatpush1.msra.mxu0 %v49
  %81 = vmatprep.subr.mxu0 0.0
  %82 = vmatpush1.msra.mxu0 %v50
  %83 = vmatprep.subr.mxu0 0.0
  %84 = vmatpush1.msra.mxu0 %v51
  %85 = vmatprep.subr.mxu0 0.0
  %86 = vmatpush1.msra.mxu0 0.0
  %87 = vmatprep.subr.mxu0 0.0
  %88 = vmatpush1.msra.mxu0 0.0
  %89 = vmatprep.subr.mxu0 0.0
  %90 = vmatpush1.msra.mxu0 0.0
  %91 = vmatprep.subr.mxu0 0.0
  %92 = vmatpush1.msra.mxu0 0.0
  %93 = vmatprep.subr.mxu0 0.0
  %94 = vmatpush1.msra.mxu0 0.0
  %95 = vmatprep.subr.mxu0 0.0
  %96 = vmatpush1.msra.mxu0 0.0
  %97 = vmatprep.subr.mxu0 0.0
  %98 = vmatpush1.msra.mxu0 0.0
  %99 = vmatprep.subr.mxu0 0.0
  %100 = vmatpush1.msra.mxu0 0.0
  %101 = vmatprep.subr.mxu0 0.0
  %102 = vmatpush1.msra.mxu0 0.0
  %103 = vmatprep.subr.mxu0 0.0
  %104 = vmatpush1.msra.mxu0 0.0
  %105 = vmatprep.subr.mxu0 0.0
  %106 = vmatpush1.msra.mxu0 0.0
  %107 = vmatprep.subr.mxu0 0.0
  %108 = vmatpush1.msra.mxu0 0.0
  %109 = vmatprep.subr.mxu0 0.0
  %110 = vmatpush1.msra.mxu0 0.0
  %111 = vmatprep.subr.mxu0 0.0
  %112 = vmatpush1.msra.mxu0 0.0
  %113 = vmatprep.subr.mxu0 0.0
  %114 = vmatpush1.msra.mxu0 0.0
  %115 = vmatprep.subr.mxu0 0.0
  %116 = vmatpush1.msra.mxu0 0.0
  %117 = vmatprep.mubr.f32.mxu0 0.0
  %118 = vmatmul.mubr.f32.gmra.mrb[0].mxu0 %v34
  %v119 = vpop.f32.mrb[0].mxu0
  %v120 = vadd.f32 %v52, %v119
  %v121 = vpop.f32.mrb[0].mxu0
  %122 = vmatprep.mubr.f32.mxu0 0.0
  %123 = vmatmul.mubr.f32.gmra.mrb[0].mxu0 %v35
  %v124 = vpop.f32.mrb[0].mxu0
  %v125 = vadd.f32 %v52, %v124
  %v126 = vpop.f32.mrb[0].mxu0
  %127 = vdwg.mxu0
  %v128 = vld [vmem:[%s4 + $0x2] sm:$0x1]
  %v129 = vlaneseq
  %v130 = vshrl.u32 %v129, 7
  %v131 = vsub.s32 0, %v130
  %v132 = vrot.slane %v128, %v131
  %v133 = vadd.f32 %v120, %v132
  %v134 = vadd.f32 %v125, %v132
  %v135 = vld [vmem:[%s4] sm:$0x1]
  %v136 = vld [vmem:[%s4 + $0x1] sm:$0x1]
  %vm137 = vcmask 261120
  %v138 = vsel %vm137, %v133, 0.0
  %139 = vadd.xlane.f32.xlu0 %v138
  %v140 = vpop.xlane.xlu0 %139
  %v141 = vsel %vm137, %v134, 0.0
  %142 = vadd.xlane.f32.xlu0 %v141
  %v143 = vpop.xlane.xlu0 %142
  %v144 = vrcp.pop 32.0
  %v145 = vmul.f32 %v140, %v144
  %v146 = vmul.f32 %v143, %v144
  %v147 = vsub.f32 %v133, %v145
  %v148 = vsub.f32 %v134, %v146
  %v149 = vmul.f32 %v147, %v147
  %v150 = vmul.f32 %v148, %v148
  %v151 = vsel %vm137, %v149, 0.0
  %152 = vadd.xlane.f32.xlu0 %v151
  %v153 = vpop.xlane.xlu0 %152
  %v154 = vsel %vm137, %v150, 0.0
  %155 = vadd.xlane.f32.xlu0 %v154
  %v156 = vpop.xlane.xlu0 %155
  %v157 = vmul.f32 %v153, %v144
  %v158 = vmul.f32 %v156, %v144
  %v159 = vadd.f32 %v157, 1e-12
  %v160 = vadd.f32 %v158, 1e-12
  %v161 = vrsqrt.pop %v159
  %v162 = vrsqrt.pop %v160
  %v163 = vmul.f32 %v147, %v161
  %v164 = vmul.f32 %v148, %v162
  %v165 = vlaneseq
  %v166 = vshrl.u32 %v165, 7
  %v167 = vsub.s32 0, %v166
  %v168 = vrot.slane %v135, %v167
  %v169 = vmul.f32 %v163, %v168
  %v170 = vmul.f32 %v164, %v168
  %v171 = vlaneseq
  %v172 = vshrl.u32 %v171, 7
  %v173 = vsub.s32 0, %v172
  %v174 = vrot.slane %v136, %v173
  %v175 = vadd.f32 %v169, %v174
  %v176 = vadd.f32 %v170, %v174
  %v177 = vlaneseq
  %v178 = vshrl.u32 %v177, 7
  %v179 = vadd.s32 %v178, 8
  %v180 = vcvt.s32.f32 %v178
  %v181 = vcvt.s32.f32 %v179
  %v182 = vcvt.s32.f32 %v23
  %v183 = vadd.f32 %v180, 0.5
  %v184 = vadd.f32 %v181, 0.5
  %v185 = vmul.f32 %v183, 0.125
  %v186 = vmul.f32 %v184, 0.125
  %v187 = vfloor.f32 %v185
  %v188 = vfloor.f32 %v186
  %v189 = vadd.f32 %v182, 0.5
  %v190 = vmul.f32 %v189, 0.125
  %v191 = vfloor.f32 %v190
  %vm192 = vcmp.eq.f32.partialorder %v187, %v191
  %vm193 = vcmp.eq.f32.partialorder %v188, %v191
  %v194 = vld [vmem:[%s1] sm:$0x1]
  %vm195 = vcmp.gt.f32.partialorder %v194, 0.5
  %v196 = vsel %vm195, 1, 0
  %v197 = vlaneseq
  %v198 = vshrl.u32 %v197, 7
  %v199 = vsub.s32 0, %v198
  %v200 = vrot.slane %v196, %v199
  %vm201 = vcmp.eq.s32.totalorder %v200, 1
  %vm202 = vmand %vm192, %vm201
  %vm203 = vmand %vm193, %vm201
  %v204 = vsel %vm202, 0.0, -1e+09
  %v205 = vsel %vm203, 0.0, -1e+09
  %v206 = vld [vmem:[%s3] sm:$0xff]
  %v207 = vld [vmem:[%s3 + $0x8] sm:$0xff]
  %v208 = vld [vmem:[%s3 + $0x10] sm:$0xff]
  %v209 = vld [vmem:[%s3 + $0x18] sm:$0xff]
  %v210 = vld [vmem:[%s4 + $0x8] sm:$0x1]
  %v211 = vlaneseq
  %v212 = vshrl.u32 %v211, 7
  %v213 = vsub.s32 0, %v212
  %v214 = vrot.slane %v210, %v213
  %v216 = vsel %vm137, %v175, 0
  %v219 = vsel %vm137, %v176, 0
  %221 = vmatprep.subr.mxu0 0.0
  %222 = vmatpush1.msra.mxu0 %v206
  %223 = vmatprep.subr.mxu0 0.0
  %224 = vmatpush1.msra.mxu0 %v207
  %225 = vmatprep.subr.mxu0 0.0
  %226 = vmatpush1.msra.mxu0 %v208
  %227 = vmatprep.subr.mxu0 0.0
  %228 = vmatpush1.msra.mxu0 %v209
  %229 = vmatprep.subr.mxu0 0.0
  %230 = vmatpush1.msra.mxu0 0.0
  %231 = vmatprep.subr.mxu0 0.0
  %232 = vmatpush1.msra.mxu0 0.0
  %233 = vmatprep.subr.mxu0 0.0
  %234 = vmatpush1.msra.mxu0 0.0
  %235 = vmatprep.subr.mxu0 0.0
  %236 = vmatpush1.msra.mxu0 0.0
  %237 = vmatprep.subr.mxu0 0.0
  %238 = vmatpush1.msra.mxu0 0.0
  %239 = vmatprep.subr.mxu0 0.0
  %240 = vmatpush1.msra.mxu0 0.0
  %241 = vmatprep.subr.mxu0 0.0
  %242 = vmatpush1.msra.mxu0 0.0
  %243 = vmatprep.subr.mxu0 0.0
  %244 = vmatpush1.msra.mxu0 0.0
  %245 = vmatprep.subr.mxu0 0.0
  %246 = vmatpush1.msra.mxu0 0.0
  %247 = vmatprep.subr.mxu0 0.0
  %248 = vmatpush1.msra.mxu0 0.0
  %249 = vmatprep.subr.mxu0 0.0
  %250 = vmatpush1.msra.mxu0 0.0
  %251 = vmatprep.subr.mxu0 0.0
  %252 = vmatpush1.msra.mxu0 0.0
  %253 = vmatprep.subr.mxu0 0.0
  %254 = vmatpush1.msra.mxu0 0.0
  %255 = vmatprep.subr.mxu0 0.0
  %256 = vmatpush1.msra.mxu0 0.0
  %257 = vmatprep.subr.mxu0 0.0
  %258 = vmatpush1.msra.mxu0 0.0
  %259 = vmatprep.subr.mxu0 0.0
  %260 = vmatpush1.msra.mxu0 0.0
  %261 = vmatprep.subr.mxu0 0.0
  %262 = vmatpush1.msra.mxu0 0.0
  %263 = vmatprep.subr.mxu0 0.0
  %264 = vmatpush1.msra.mxu0 0.0
  %265 = vmatprep.subr.mxu0 0.0
  %266 = vmatpush1.msra.mxu0 0.0
  %267 = vmatprep.subr.mxu0 0.0
  %268 = vmatpush1.msra.mxu0 0.0
  %269 = vmatprep.subr.mxu0 0.0
  %270 = vmatpush1.msra.mxu0 0.0
  %271 = vmatprep.subr.mxu0 0.0
  %272 = vmatpush1.msra.mxu0 0.0
  %273 = vmatprep.subr.mxu0 0.0
  %274 = vmatpush1.msra.mxu0 0.0
  %275 = vmatprep.subr.mxu0 0.0
  %276 = vmatpush1.msra.mxu0 0.0
  %277 = vmatprep.subr.mxu0 0.0
  %278 = vmatpush1.msra.mxu0 0.0
  %279 = vmatprep.subr.mxu0 0.0
  %280 = vmatpush1.msra.mxu0 0.0
  %281 = vmatprep.subr.mxu0 0.0
  %282 = vmatpush1.msra.mxu0 0.0
  %283 = vmatprep.subr.mxu0 0.0
  %284 = vmatpush1.msra.mxu0 0.0
  %285 = vmatprep.mubr.f32.mxu0 0.0
  %286 = vmatmul.mubr.f32.gmra.mrb[0].mxu0 %v216
  %v287 = vpop.f32.mrb[0].mxu0
  %v288 = vadd.f32 %v214, %v287
  %v289 = vpop.f32.mrb[0].mxu0
  %290 = vmatprep.mubr.f32.mxu0 0.0
  %291 = vmatmul.mubr.f32.gmra.mrb[0].mxu0 %v219
  %v292 = vpop.f32.mrb[0].mxu0
  %v293 = vadd.f32 %v214, %v292
  %v294 = vpop.f32.mrb[0].mxu0
  %295 = vdwg.mxu0
  %298 = vrot.lane.b32.xlu0 %v288, 96
  %v299 = vpop.permute.xlu0 %298
  %300 = vrot.lane.b32.xlu0 %v293, 96
  %v301 = vpop.permute.xlu0 %300
  %vm302 = vcmask 130048
  %v303 = vsel %vm302, %v288, 0
  %v305 = vsel %vm302, %v293, 0
  %v307 = vsel %vm302, %v299, 0
  %v309 = vsel %vm302, %v301, 0
  %311 = vmatprep.subr.mxu0 0.0
  %312 = vmatpush1.xpose.msra.mxu0 %v307
  %313 = vmatprep.subr.mxu0 0.0
  %314 = vmatpush1.xpose.msra.mxu0 %v309
  %315 = vmatprep.subr.mxu0 0.0
  %316 = vmatpush1.xpose.msra.mxu0 0.0
  %317 = vmatprep.subr.mxu0 0.0
  %318 = vmatpush1.xpose.msra.mxu0 0.0
  %319 = vmatprep.subr.mxu0 0.0
  %320 = vmatpush1.xpose.msra.mxu0 0.0
  %321 = vmatprep.subr.mxu0 0.0
  %322 = vmatpush1.xpose.msra.mxu0 0.0
  %323 = vmatprep.subr.mxu0 0.0
  %324 = vmatpush1.xpose.msra.mxu0 0.0
  %325 = vmatprep.subr.mxu0 0.0
  %326 = vmatpush1.xpose.msra.mxu0 0.0
  %327 = vmatprep.subr.mxu0 0.0
  %328 = vmatpush1.xpose.msra.mxu0 0.0
  %329 = vmatprep.subr.mxu0 0.0
  %330 = vmatpush1.xpose.msra.mxu0 0.0
  %331 = vmatprep.subr.mxu0 0.0
  %332 = vmatpush1.xpose.msra.mxu0 0.0
  %333 = vmatprep.subr.mxu0 0.0
  %334 = vmatpush1.xpose.msra.mxu0 0.0
  %335 = vmatprep.subr.mxu0 0.0
  %336 = vmatpush1.xpose.msra.mxu0 0.0
  %337 = vmatprep.subr.mxu0 0.0
  %338 = vmatpush1.xpose.msra.mxu0 0.0
  %339 = vmatprep.subr.mxu0 0.0
  %340 = vmatpush1.xpose.msra.mxu0 0.0
  %341 = vmatprep.subr.mxu0 0.0
  %342 = vmatpush1.xpose.msra.mxu0 0.0
  %343 = vmatprep.subr.mxu0 0.0
  %344 = vmatpush1.xpose.msra.mxu0 0.0
  %345 = vmatprep.subr.mxu0 0.0
  %346 = vmatpush1.xpose.msra.mxu0 0.0
  %347 = vmatprep.subr.mxu0 0.0
  %348 = vmatpush1.xpose.msra.mxu0 0.0
  %349 = vmatprep.subr.mxu0 0.0
  %350 = vmatpush1.xpose.msra.mxu0 0.0
  %351 = vmatprep.subr.mxu0 0.0
  %352 = vmatpush1.xpose.msra.mxu0 0.0
  %353 = vmatprep.subr.mxu0 0.0
  %354 = vmatpush1.xpose.msra.mxu0 0.0
  %355 = vmatprep.subr.mxu0 0.0
  %356 = vmatpush1.xpose.msra.mxu0 0.0
  %357 = vmatprep.subr.mxu0 0.0
  %358 = vmatpush1.xpose.msra.mxu0 0.0
  %359 = vmatprep.subr.mxu0 0.0
  %360 = vmatpush1.xpose.msra.mxu0 0.0
  %361 = vmatprep.subr.mxu0 0.0
  %362 = vmatpush1.xpose.msra.mxu0 0.0
  %363 = vmatprep.subr.mxu0 0.0
  %364 = vmatpush1.xpose.msra.mxu0 0.0
  %365 = vmatprep.subr.mxu0 0.0
  %366 = vmatpush1.xpose.msra.mxu0 0.0
  %367 = vmatprep.subr.mxu0 0.0
  %368 = vmatpush1.xpose.msra.mxu0 0.0
  %369 = vmatprep.subr.mxu0 0.0
  %370 = vmatpush1.xpose.msra.mxu0 0.0
  %371 = vmatprep.subr.mxu0 0.0
  %372 = vmatpush1.xpose.msra.mxu0 0.0
  %373 = vmatprep.subr.mxu0 0.0
  %374 = vmatpush1.xpose.msra.mxu0 0.0
  %375 = vmatprep.mubr.f32.mxu0 0.0
  %376 = vmatmul.mubr.f32.gmra.mrb[0].mxu0 %v303
  %v377 = vpop.f32.mrb[0].mxu0
  %v378 = vadd.f32 0.0, %v377
  %v379 = vpop.f32.mrb[0].mxu0
  %380 = vmatprep.mubr.f32.mxu0 0.0
  %381 = vmatmul.mubr.f32.gmra.mrb[0].mxu0 %v305
  %v382 = vpop.f32.mrb[0].mxu0
  %v383 = vadd.f32 0.0, %v382
  %v384 = vpop.f32.mrb[0].mxu0
  %385 = vdwg.mxu0
  %v386 = vmul.f32 %v378, 0.25
  %v387 = vmul.f32 %v383, 0.25
  %v388 = vadd.f32 %v386, %v204
  %v389 = vadd.f32 %v387, %v205
  %v390 = vsel %vm302, %v388, -inf
  %391 = vmax.xlane.f32.xlu0 %v390
  %v392 = vpop.xlane.xlu0 %391
  %v393 = vsel %vm302, %v389, -inf
  %394 = vmax.xlane.f32.xlu0 %v393
  %v395 = vpop.xlane.xlu0 %394
  %v396 = vsub.f32 %v388, %v392
  %v397 = vsub.f32 %v389, %v395
  %v398 = vmul.f32 %v396, 1.442695
  %v399 = vpow.pop %v398
  %v400 = vmul.f32 %v397, 1.442695
  %v401 = vpow.pop %v400
  %v402 = vsel %vm302, %v399, 0.0
  %403 = vadd.xlane.f32.xlu0 %v402
  %v404 = vpop.xlane.xlu0 %403
  %v405 = vsel %vm302, %v401, 0.0
  %406 = vadd.xlane.f32.xlu0 %v405
  %v407 = vpop.xlane.xlu0 %406
  %v408 = vrcp.pop %v404
  %v409 = vrcp.pop %v407
  %v410 = vmul.f32 %v399, %v408
  %v411 = vmul.f32 %v401, %v409
  %412 = vrot.lane.b32.xlu0 %v288, 64
  %v413 = vpop.permute.xlu0 %412
  %414 = vrot.lane.b32.xlu0 %v293, 64
  %v415 = vpop.permute.xlu0 %414
  %v419 = vsel %vm302, %v410, 0
  %v422 = vsel %vm302, %v411, 0
  %424 = vmatprep.subr.mxu0 0.0
  %425 = vmatpush1.msra.mxu0 %v413
  %426 = vmatprep.subr.mxu0 0.0
  %427 = vmatpush1.msra.mxu0 %v415
  %428 = vmatprep.subr.mxu0 0.0
  %429 = vmatpush1.msra.mxu0 0.0
  %430 = vmatprep.subr.mxu0 0.0
  %431 = vmatpush1.msra.mxu0 0.0
  %432 = vmatprep.subr.mxu0 0.0
  %433 = vmatpush1.msra.mxu0 0.0
  %434 = vmatprep.subr.mxu0 0.0
  %435 = vmatpush1.msra.mxu0 0.0
  %436 = vmatprep.subr.mxu0 0.0
  %437 = vmatpush1.msra.mxu0 0.0
  %438 = vmatprep.subr.mxu0 0.0
  %439 = vmatpush1.msra.mxu0 0.0
  %440 = vmatprep.subr.mxu0 0.0
  %441 = vmatpush1.msra.mxu0 0.0
  %442 = vmatprep.subr.mxu0 0.0
  %443 = vmatpush1.msra.mxu0 0.0
  %444 = vmatprep.subr.mxu0 0.0
  %445 = vmatpush1.msra.mxu0 0.0
  %446 = vmatprep.subr.mxu0 0.0
  %447 = vmatpush1.msra.mxu0 0.0
  %448 = vmatprep.subr.mxu0 0.0
  %449 = vmatpush1.msra.mxu0 0.0
  %450 = vmatprep.subr.mxu0 0.0
  %451 = vmatpush1.msra.mxu0 0.0
  %452 = vmatprep.subr.mxu0 0.0
  %453 = vmatpush1.msra.mxu0 0.0
  %454 = vmatprep.subr.mxu0 0.0
  %455 = vmatpush1.msra.mxu0 0.0
  %456 = vmatprep.subr.mxu0 0.0
  %457 = vmatpush1.msra.mxu0 0.0
  %458 = vmatprep.subr.mxu0 0.0
  %459 = vmatpush1.msra.mxu0 0.0
  %460 = vmatprep.subr.mxu0 0.0
  %461 = vmatpush1.msra.mxu0 0.0
  %462 = vmatprep.subr.mxu0 0.0
  %463 = vmatpush1.msra.mxu0 0.0
  %464 = vmatprep.subr.mxu0 0.0
  %465 = vmatpush1.msra.mxu0 0.0
  %466 = vmatprep.subr.mxu0 0.0
  %467 = vmatpush1.msra.mxu0 0.0
  %468 = vmatprep.subr.mxu0 0.0
  %469 = vmatpush1.msra.mxu0 0.0
  %470 = vmatprep.subr.mxu0 0.0
  %471 = vmatpush1.msra.mxu0 0.0
  %472 = vmatprep.subr.mxu0 0.0
  %473 = vmatpush1.msra.mxu0 0.0
  %474 = vmatprep.subr.mxu0 0.0
  %475 = vmatpush1.msra.mxu0 0.0
  %476 = vmatprep.subr.mxu0 0.0
  %477 = vmatpush1.msra.mxu0 0.0
  %478 = vmatprep.subr.mxu0 0.0
  %479 = vmatpush1.msra.mxu0 0.0
  %480 = vmatprep.subr.mxu0 0.0
  %481 = vmatpush1.msra.mxu0 0.0
  %482 = vmatprep.subr.mxu0 0.0
  %483 = vmatpush1.msra.mxu0 0.0
  %484 = vmatprep.subr.mxu0 0.0
  %485 = vmatpush1.msra.mxu0 0.0
  %486 = vmatprep.subr.mxu0 0.0
  %487 = vmatpush1.msra.mxu0 0.0
  %488 = vmatprep.mubr.f32.mxu0 0.0
  %489 = vmatmul.mubr.f32.gmra.mrb[0].mxu0 %v419
  %v490 = vpop.f32.mrb[0].mxu0
  %v491 = vadd.f32 0.0, %v490
  %v492 = vpop.f32.mrb[0].mxu0
  %493 = vmatprep.mubr.f32.mxu0 0.0
  %494 = vmatmul.mubr.f32.gmra.mrb[0].mxu0 %v422
  %v495 = vpop.f32.mrb[0].mxu0
  %v496 = vadd.f32 0.0, %v495
  %v497 = vpop.f32.mrb[0].mxu0
  %498 = vdwg.mxu0
  %499 = vrot.lane.b32.xlu0 %v288, 112
  %v500 = vpop.permute.xlu0 %499
  %501 = vrot.lane.b32.xlu0 %v293, 112
  %v502 = vpop.permute.xlu0 %501
  %503 = vrot.lane.b32.xlu0 %v288, 80
  %v504 = vpop.permute.xlu0 %503
  %505 = vrot.lane.b32.xlu0 %v293, 80
  %v506 = vpop.permute.xlu0 %505
  %v507 = vsel %vm302, %v500, 0
  %v509 = vsel %vm302, %v502, 0
  %v511 = vsel %vm302, %v504, 0
  %v513 = vsel %vm302, %v506, 0
  %515 = vmatprep.subr.mxu0 0.0
  %516 = vmatpush1.xpose.msra.mxu0 %v511
  %517 = vmatprep.subr.mxu0 0.0
  %518 = vmatpush1.xpose.msra.mxu0 %v513
  %519 = vmatprep.subr.mxu0 0.0
  %520 = vmatpush1.xpose.msra.mxu0 0.0
  %521 = vmatprep.subr.mxu0 0.0
  %522 = vmatpush1.xpose.msra.mxu0 0.0
  %523 = vmatprep.subr.mxu0 0.0
  %524 = vmatpush1.xpose.msra.mxu0 0.0
  %525 = vmatprep.subr.mxu0 0.0
  %526 = vmatpush1.xpose.msra.mxu0 0.0
  %527 = vmatprep.subr.mxu0 0.0
  %528 = vmatpush1.xpose.msra.mxu0 0.0
  %529 = vmatprep.subr.mxu0 0.0
  %530 = vmatpush1.xpose.msra.mxu0 0.0
  %531 = vmatprep.subr.mxu0 0.0
  %532 = vmatpush1.xpose.msra.mxu0 0.0
  %533 = vmatprep.subr.mxu0 0.0
  %534 = vmatpush1.xpose.msra.mxu0 0.0
  %535 = vmatprep.subr.mxu0 0.0
  %536 = vmatpush1.xpose.msra.mxu0 0.0
  %537 = vmatprep.subr.mxu0 0.0
  %538 = vmatpush1.xpose.msra.mxu0 0.0
  %539 = vmatprep.subr.mxu0 0.0
  %540 = vmatpush1.xpose.msra.mxu0 0.0
  %541 = vmatprep.subr.mxu0 0.0
  %542 = vmatpush1.xpose.msra.mxu0 0.0
  %543 = vmatprep.subr.mxu0 0.0
  %544 = vmatpush1.xpose.msra.mxu0 0.0
  %545 = vmatprep.subr.mxu0 0.0
  %546 = vmatpush1.xpose.msra.mxu0 0.0
  %547 = vmatprep.subr.mxu0 0.0
  %548 = vmatpush1.xpose.msra.mxu0 0.0
  %549 = vmatprep.subr.mxu0 0.0
  %550 = vmatpush1.xpose.msra.mxu0 0.0
  %551 = vmatprep.subr.mxu0 0.0
  %552 = vmatpush1.xpose.msra.mxu0 0.0
  %553 = vmatprep.subr.mxu0 0.0
  %554 = vmatpush1.xpose.msra.mxu0 0.0
  %555 = vmatprep.subr.mxu0 0.0
  %556 = vmatpush1.xpose.msra.mxu0 0.0
  %557 = vmatprep.subr.mxu0 0.0
  %558 = vmatpush1.xpose.msra.mxu0 0.0
  %559 = vmatprep.subr.mxu0 0.0
  %560 = vmatpush1.xpose.msra.mxu0 0.0
  %561 = vmatprep.subr.mxu0 0.0
  %562 = vmatpush1.xpose.msra.mxu0 0.0
  %563 = vmatprep.subr.mxu0 0.0
  %564 = vmatpush1.xpose.msra.mxu0 0.0
  %565 = vmatprep.subr.mxu0 0.0
  %566 = vmatpush1.xpose.msra.mxu0 0.0
  %567 = vmatprep.subr.mxu0 0.0
  %568 = vmatpush1.xpose.msra.mxu0 0.0
  %569 = vmatprep.subr.mxu0 0.0
  %570 = vmatpush1.xpose.msra.mxu0 0.0
  %571 = vmatprep.subr.mxu0 0.0
  %572 = vmatpush1.xpose.msra.mxu0 0.0
  %573 = vmatprep.subr.mxu0 0.0
  %574 = vmatpush1.xpose.msra.mxu0 0.0
  %575 = vmatprep.subr.mxu0 0.0
  %576 = vmatpush1.xpose.msra.mxu0 0.0
  %577 = vmatprep.subr.mxu0 0.0
  %578 = vmatpush1.xpose.msra.mxu0 0.0
  %579 = vmatprep.mubr.f32.mxu0 0.0
  %580 = vmatmul.mubr.f32.gmra.mrb[0].mxu0 %v507
  %v581 = vpop.f32.mrb[0].mxu0
  %v582 = vadd.f32 0.0, %v581
  %v583 = vpop.f32.mrb[0].mxu0
  %584 = vmatprep.mubr.f32.mxu0 0.0
  %585 = vmatmul.mubr.f32.gmra.mrb[0].mxu0 %v509
  %v586 = vpop.f32.mrb[0].mxu0
  %v587 = vadd.f32 0.0, %v586
  %v588 = vpop.f32.mrb[0].mxu0
  %589 = vdwg.mxu0
  %v590 = vmul.f32 %v582, 0.25
  %v591 = vmul.f32 %v587, 0.25
  %v592 = vadd.f32 %v590, %v204
  %v593 = vadd.f32 %v591, %v205
  %v594 = vsel %vm302, %v592, -inf
  %595 = vmax.xlane.f32.xlu0 %v594
  %v596 = vpop.xlane.xlu0 %595
  %v597 = vsel %vm302, %v593, -inf
  %598 = vmax.xlane.f32.xlu0 %v597
  %v599 = vpop.xlane.xlu0 %598
  %v600 = vsub.f32 %v592, %v596
  %v601 = vsub.f32 %v593, %v599
  %v602 = vmul.f32 %v600, 1.442695
  %v603 = vpow.pop %v602
  %v604 = vmul.f32 %v601, 1.442695
  %v605 = vpow.pop %v604
  %v606 = vsel %vm302, %v603, 0.0
  %607 = vadd.xlane.f32.xlu0 %v606
  %v608 = vpop.xlane.xlu0 %607
  %v609 = vsel %vm302, %v605, 0.0
  %610 = vadd.xlane.f32.xlu0 %v609
  %v611 = vpop.xlane.xlu0 %610
  %v612 = vrcp.pop %v608
  %v613 = vrcp.pop %v611
  %v614 = vmul.f32 %v603, %v612
  %v615 = vmul.f32 %v605, %v613
  %616 = vrot.lane.b32.xlu0 %v288, 48
  %v617 = vpop.permute.xlu0 %616
  %618 = vrot.lane.b32.xlu0 %v293, 48
  %v619 = vpop.permute.xlu0 %618
  %v623 = vsel %vm302, %v614, 0
  %v626 = vsel %vm302, %v615, 0
  %628 = vmatprep.subr.mxu0 0.0
  %629 = vmatpush1.msra.mxu0 %v617
  %630 = vmatprep.subr.mxu0 0.0
  %631 = vmatpush1.msra.mxu0 %v619
  %632 = vmatprep.subr.mxu0 0.0
  %633 = vmatpush1.msra.mxu0 0.0
  %634 = vmatprep.subr.mxu0 0.0
  %635 = vmatpush1.msra.mxu0 0.0
  %636 = vmatprep.subr.mxu0 0.0
  %637 = vmatpush1.msra.mxu0 0.0
  %638 = vmatprep.subr.mxu0 0.0
  %639 = vmatpush1.msra.mxu0 0.0
  %640 = vmatprep.subr.mxu0 0.0
  %641 = vmatpush1.msra.mxu0 0.0
  %642 = vmatprep.subr.mxu0 0.0
  %643 = vmatpush1.msra.mxu0 0.0
  %644 = vmatprep.subr.mxu0 0.0
  %645 = vmatpush1.msra.mxu0 0.0
  %646 = vmatprep.subr.mxu0 0.0
  %647 = vmatpush1.msra.mxu0 0.0
  %648 = vmatprep.subr.mxu0 0.0
  %649 = vmatpush1.msra.mxu0 0.0
  %650 = vmatprep.subr.mxu0 0.0
  %651 = vmatpush1.msra.mxu0 0.0
  %652 = vmatprep.subr.mxu0 0.0
  %653 = vmatpush1.msra.mxu0 0.0
  %654 = vmatprep.subr.mxu0 0.0
  %655 = vmatpush1.msra.mxu0 0.0
  %656 = vmatprep.subr.mxu0 0.0
  %657 = vmatpush1.msra.mxu0 0.0
  %658 = vmatprep.subr.mxu0 0.0
  %659 = vmatpush1.msra.mxu0 0.0
  %660 = vmatprep.subr.mxu0 0.0
  %661 = vmatpush1.msra.mxu0 0.0
  %662 = vmatprep.subr.mxu0 0.0
  %663 = vmatpush1.msra.mxu0 0.0
  %664 = vmatprep.subr.mxu0 0.0
  %665 = vmatpush1.msra.mxu0 0.0
  %666 = vmatprep.subr.mxu0 0.0
  %667 = vmatpush1.msra.mxu0 0.0
  %668 = vmatprep.subr.mxu0 0.0
  %669 = vmatpush1.msra.mxu0 0.0
  %670 = vmatprep.subr.mxu0 0.0
  %671 = vmatpush1.msra.mxu0 0.0
  %672 = vmatprep.subr.mxu0 0.0
  %673 = vmatpush1.msra.mxu0 0.0
  %674 = vmatprep.subr.mxu0 0.0
  %675 = vmatpush1.msra.mxu0 0.0
  %676 = vmatprep.subr.mxu0 0.0
  %677 = vmatpush1.msra.mxu0 0.0
  %678 = vmatprep.subr.mxu0 0.0
  %679 = vmatpush1.msra.mxu0 0.0
  %680 = vmatprep.subr.mxu0 0.0
  %681 = vmatpush1.msra.mxu0 0.0
  %682 = vmatprep.subr.mxu0 0.0
  %683 = vmatpush1.msra.mxu0 0.0
  %684 = vmatprep.subr.mxu0 0.0
  %685 = vmatpush1.msra.mxu0 0.0
  %686 = vmatprep.subr.mxu0 0.0
  %687 = vmatpush1.msra.mxu0 0.0
  %688 = vmatprep.subr.mxu0 0.0
  %689 = vmatpush1.msra.mxu0 0.0
  %690 = vmatprep.subr.mxu0 0.0
  %691 = vmatpush1.msra.mxu0 0.0
  %692 = vmatprep.mubr.f32.mxu0 0.0
  %693 = vmatmul.mubr.f32.gmra.mrb[0].mxu0 %v623
  %v694 = vpop.f32.mrb[0].mxu0
  %v695 = vadd.f32 0.0, %v694
  %v696 = vpop.f32.mrb[0].mxu0
  %697 = vmatprep.mubr.f32.mxu0 0.0
  %698 = vmatmul.mubr.f32.gmra.mrb[0].mxu0 %v626
  %v699 = vpop.f32.mrb[0].mxu0
  %v700 = vadd.f32 0.0, %v699
  %v701 = vpop.f32.mrb[0].mxu0
  %702 = vdwg.mxu0
  %705 = vrot.lane.b32.xlu0 %v695, 16
  %v706 = vpop.permute.xlu0 %705
  %707 = vrot.lane.b32.xlu0 %v700, 16
  %v708 = vpop.permute.xlu0 %707
  %v711 = vsel %vm302, %v491, %v706
  %v712 = vsel %vm302, %v496, %v708
  %v713 = vld [vmem:[%s2 + $0xb0] sm:$0xff]
  %v714 = vld [vmem:[%s2 + $0xb8] sm:$0xff]
  %v715 = vld [vmem:[%s2 + $0xc0] sm:$0xff]
  %v716 = vld [vmem:[%s2 + $0xc8] sm:$0xff]
  %v717 = vld [vmem:[%s4 + $0x9] sm:$0x1]
  %v718 = vlaneseq
  %v719 = vshrl.u32 %v718, 7
  %v720 = vsub.s32 0, %v719
  %v721 = vrot.slane %v717, %v720
  %v723 = vsel %vm137, %v711, 0
  %v726 = vsel %vm137, %v712, 0
  %728 = vmatprep.subr.mxu0 0.0
  %729 = vmatpush1.msra.mxu0 %v713
  %730 = vmatprep.subr.mxu0 0.0
  %731 = vmatpush1.msra.mxu0 %v714
  %732 = vmatprep.subr.mxu0 0.0
  %733 = vmatpush1.msra.mxu0 %v715
  %734 = vmatprep.subr.mxu0 0.0
  %735 = vmatpush1.msra.mxu0 %v716
  %736 = vmatprep.subr.mxu0 0.0
  %737 = vmatpush1.msra.mxu0 0.0
  %738 = vmatprep.subr.mxu0 0.0
  %739 = vmatpush1.msra.mxu0 0.0
  %740 = vmatprep.subr.mxu0 0.0
  %741 = vmatpush1.msra.mxu0 0.0
  %742 = vmatprep.subr.mxu0 0.0
  %743 = vmatpush1.msra.mxu0 0.0
  %744 = vmatprep.subr.mxu0 0.0
  %745 = vmatpush1.msra.mxu0 0.0
  %746 = vmatprep.subr.mxu0 0.0
  %747 = vmatpush1.msra.mxu0 0.0
  %748 = vmatprep.subr.mxu0 0.0
  %749 = vmatpush1.msra.mxu0 0.0
  %750 = vmatprep.subr.mxu0 0.0
  %751 = vmatpush1.msra.mxu0 0.0
  %752 = vmatprep.subr.mxu0 0.0
  %753 = vmatpush1.msra.mxu0 0.0
  %754 = vmatprep.subr.mxu0 0.0
  %755 = vmatpush1.msra.mxu0 0.0
  %756 = vmatprep.subr.mxu0 0.0
  %757 = vmatpush1.msra.mxu0 0.0
  %758 = vmatprep.subr.mxu0 0.0
  %759 = vmatpush1.msra.mxu0 0.0
  %760 = vmatprep.subr.mxu0 0.0
  %761 = vmatpush1.msra.mxu0 0.0
  %762 = vmatprep.subr.mxu0 0.0
  %763 = vmatpush1.msra.mxu0 0.0
  %764 = vmatprep.subr.mxu0 0.0
  %765 = vmatpush1.msra.mxu0 0.0
  %766 = vmatprep.subr.mxu0 0.0
  %767 = vmatpush1.msra.mxu0 0.0
  %768 = vmatprep.subr.mxu0 0.0
  %769 = vmatpush1.msra.mxu0 0.0
  %770 = vmatprep.subr.mxu0 0.0
  %771 = vmatpush1.msra.mxu0 0.0
  %772 = vmatprep.subr.mxu0 0.0
  %773 = vmatpush1.msra.mxu0 0.0
  %774 = vmatprep.subr.mxu0 0.0
  %775 = vmatpush1.msra.mxu0 0.0
  %776 = vmatprep.subr.mxu0 0.0
  %777 = vmatpush1.msra.mxu0 0.0
  %778 = vmatprep.subr.mxu0 0.0
  %779 = vmatpush1.msra.mxu0 0.0
  %780 = vmatprep.subr.mxu0 0.0
  %781 = vmatpush1.msra.mxu0 0.0
  %782 = vmatprep.subr.mxu0 0.0
  %783 = vmatpush1.msra.mxu0 0.0
  %784 = vmatprep.subr.mxu0 0.0
  %785 = vmatpush1.msra.mxu0 0.0
  %786 = vmatprep.subr.mxu0 0.0
  %787 = vmatpush1.msra.mxu0 0.0
  %788 = vmatprep.subr.mxu0 0.0
  %789 = vmatpush1.msra.mxu0 0.0
  %790 = vmatprep.subr.mxu0 0.0
  %791 = vmatpush1.msra.mxu0 0.0
  %792 = vmatprep.mubr.f32.mxu0 0.0
  %793 = vmatmul.mubr.f32.gmra.mrb[0].mxu0 %v723
  %v794 = vpop.f32.mrb[0].mxu0
  %v795 = vadd.f32 %v721, %v794
  %v796 = vpop.f32.mrb[0].mxu0
  %797 = vmatprep.mubr.f32.mxu0 0.0
  %798 = vmatmul.mubr.f32.gmra.mrb[0].mxu0 %v726
  %v799 = vpop.f32.mrb[0].mxu0
  %v800 = vadd.f32 %v721, %v799
  %v801 = vpop.f32.mrb[0].mxu0
  %802 = vdwg.mxu0
  %v803 = vadd.f32 %v175, %v795
  %v804 = vadd.f32 %v176, %v800
  %v805 = vld [vmem:[%s4 + $0xa] sm:$0x1]
  %v806 = vld [vmem:[%s4 + $0xb] sm:$0x1]
  %v807 = vsel %vm137, %v803, 0.0
  %808 = vadd.xlane.f32.xlu0 %v807
  %v809 = vpop.xlane.xlu0 %808
  %v810 = vsel %vm137, %v804, 0.0
  %811 = vadd.xlane.f32.xlu0 %v810
  %v812 = vpop.xlane.xlu0 %811
  %v813 = vmul.f32 %v809, %v144
  %v814 = vmul.f32 %v812, %v144
  %v815 = vsub.f32 %v803, %v813
  %v816 = vsub.f32 %v804, %v814
  %v817 = vmul.f32 %v815, %v815
  %v818 = vmul.f32 %v816, %v816
  %v819 = vsel %vm137, %v817, 0.0
  %820 = vadd.xlane.f32.xlu0 %v819
  %v821 = vpop.xlane.xlu0 %820
  %v822 = vsel %vm137, %v818, 0.0
  %823 = vadd.xlane.f32.xlu0 %v822
  %v824 = vpop.xlane.xlu0 %823
  %v825 = vmul.f32 %v821, %v144
  %v826 = vmul.f32 %v824, %v144
  %v827 = vadd.f32 %v825, 1e-12
  %v828 = vadd.f32 %v826, 1e-12
  %v829 = vrsqrt.pop %v827
  %v830 = vrsqrt.pop %v828
  %v831 = vmul.f32 %v815, %v829
  %v832 = vmul.f32 %v816, %v830
  %v833 = vlaneseq
  %v834 = vshrl.u32 %v833, 7
  %v835 = vsub.s32 0, %v834
  %v836 = vrot.slane %v805, %v835
  %v837 = vmul.f32 %v831, %v836
  %v838 = vmul.f32 %v832, %v836
  %v839 = vlaneseq
  %v840 = vshrl.u32 %v839, 7
  %v841 = vsub.s32 0, %v840
  %v842 = vrot.slane %v806, %v841
  %v843 = vadd.f32 %v837, %v842
  %v844 = vadd.f32 %v838, %v842
  %v845 = vld [vmem:[%s3 + $0x20] sm:$0xff]
  %v846 = vld [vmem:[%s3 + $0x28] sm:$0xff]
  %v847 = vld [vmem:[%s3 + $0x30] sm:$0xff]
  %v848 = vld [vmem:[%s3 + $0x38] sm:$0xff]
  %v849 = vld [vmem:[%s4 + $0xc] sm:$0x1]
  %v850 = vlaneseq
  %v851 = vshrl.u32 %v850, 7
  %v852 = vsub.s32 0, %v851
  %v853 = vrot.slane %v849, %v852
  %v855 = vsel %vm137, %v843, 0
  %v858 = vsel %vm137, %v844, 0
  %860 = vmatprep.subr.mxu0 0.0
  %861 = vmatpush1.msra.mxu0 %v845
  %862 = vmatprep.subr.mxu0 0.0
  %863 = vmatpush1.msra.mxu0 %v846
  %864 = vmatprep.subr.mxu0 0.0
  %865 = vmatpush1.msra.mxu0 %v847
  %866 = vmatprep.subr.mxu0 0.0
  %867 = vmatpush1.msra.mxu0 %v848
  %868 = vmatprep.subr.mxu0 0.0
  %869 = vmatpush1.msra.mxu0 0.0
  %870 = vmatprep.subr.mxu0 0.0
  %871 = vmatpush1.msra.mxu0 0.0
  %872 = vmatprep.subr.mxu0 0.0
  %873 = vmatpush1.msra.mxu0 0.0
  %874 = vmatprep.subr.mxu0 0.0
  %875 = vmatpush1.msra.mxu0 0.0
  %876 = vmatprep.subr.mxu0 0.0
  %877 = vmatpush1.msra.mxu0 0.0
  %878 = vmatprep.subr.mxu0 0.0
  %879 = vmatpush1.msra.mxu0 0.0
  %880 = vmatprep.subr.mxu0 0.0
  %881 = vmatpush1.msra.mxu0 0.0
  %882 = vmatprep.subr.mxu0 0.0
  %883 = vmatpush1.msra.mxu0 0.0
  %884 = vmatprep.subr.mxu0 0.0
  %885 = vmatpush1.msra.mxu0 0.0
  %886 = vmatprep.subr.mxu0 0.0
  %887 = vmatpush1.msra.mxu0 0.0
  %888 = vmatprep.subr.mxu0 0.0
  %889 = vmatpush1.msra.mxu0 0.0
  %890 = vmatprep.subr.mxu0 0.0
  %891 = vmatpush1.msra.mxu0 0.0
  %892 = vmatprep.subr.mxu0 0.0
  %893 = vmatpush1.msra.mxu0 0.0
  %894 = vmatprep.subr.mxu0 0.0
  %895 = vmatpush1.msra.mxu0 0.0
  %896 = vmatprep.subr.mxu0 0.0
  %897 = vmatpush1.msra.mxu0 0.0
  %898 = vmatprep.subr.mxu0 0.0
  %899 = vmatpush1.msra.mxu0 0.0
  %900 = vmatprep.subr.mxu0 0.0
  %901 = vmatpush1.msra.mxu0 0.0
  %902 = vmatprep.subr.mxu0 0.0
  %903 = vmatpush1.msra.mxu0 0.0
  %904 = vmatprep.subr.mxu0 0.0
  %905 = vmatpush1.msra.mxu0 0.0
  %906 = vmatprep.subr.mxu0 0.0
  %907 = vmatpush1.msra.mxu0 0.0
  %908 = vmatprep.subr.mxu0 0.0
  %909 = vmatpush1.msra.mxu0 0.0
  %910 = vmatprep.subr.mxu0 0.0
  %911 = vmatpush1.msra.mxu0 0.0
  %912 = vmatprep.subr.mxu0 0.0
  %913 = vmatpush1.msra.mxu0 0.0
  %914 = vmatprep.subr.mxu0 0.0
  %915 = vmatpush1.msra.mxu0 0.0
  %916 = vmatprep.subr.mxu0 0.0
  %917 = vmatpush1.msra.mxu0 0.0
  %918 = vmatprep.subr.mxu0 0.0
  %919 = vmatpush1.msra.mxu0 0.0
  %920 = vmatprep.subr.mxu0 0.0
  %921 = vmatpush1.msra.mxu0 0.0
  %922 = vmatprep.subr.mxu0 0.0
  %923 = vmatpush1.msra.mxu0 0.0
  %924 = vmatprep.mubr.f32.mxu0 0.0
  %925 = vmatmul.mubr.f32.gmra.mrb[0].mxu0 %v855
  %v926 = vpop.f32.mrb[0].mxu0
  %v927 = vadd.f32 %v853, %v926
  %v928 = vpop.f32.mrb[0].mxu0
  %929 = vmatprep.mubr.f32.mxu0 0.0
  %930 = vmatmul.mubr.f32.gmra.mrb[0].mxu0 %v858
  %v931 = vpop.f32.mrb[0].mxu0
  %v932 = vadd.f32 %v853, %v931
  %v933 = vpop.f32.mrb[0].mxu0
  %934 = vdwg.mxu0
  %v935 = vmul.f32 %v927, 0.5
  %v936 = vmul.f32 %v932, 0.5
  %v937 = vmul.f32 %v927, 0.044715
  %v938 = vmul.f32 %v932, 0.044715
  %v939 = vmul.f32 %v937, %v927
  %v940 = vmul.f32 %v938, %v932
  %v941 = vmul.f32 %v939, %v927
  %v942 = vmul.f32 %v940, %v932
  %v943 = vadd.f32 %v927, %v941
  %v944 = vadd.f32 %v932, %v942
  %v945 = vmul.f32 %v943, 0.7978846
  %v946 = vmul.f32 %v944, 0.7978846
  %v947 = vtanh.pop %v945
  %v948 = vtanh.pop %v946
  %v949 = vadd.f32 %v947, 1.0
  %v950 = vadd.f32 %v948, 1.0
  %v951 = vmul.f32 %v935, %v949
  %v952 = vmul.f32 %v936, %v950
  %v953 = vld [vmem:[%s2 + $0xd0] sm:$0xff]
  %v954 = vld [vmem:[%s2 + $0xd8] sm:$0xff]
  %v955 = vld [vmem:[%s2 + $0xe0] sm:$0xff]
  %v956 = vld [vmem:[%s2 + $0xe8] sm:$0xff]
  %v957 = vld [vmem:[%s2 + $0xf0] sm:$0xff]
  %v958 = vld [vmem:[%s2 + $0xf8] sm:$0xff]
  %v959 = vld [vmem:[%s2 + $0x100] sm:$0xff]
  %v960 = vld [vmem:[%s2 + $0x108] sm:$0xff]
  %v961 = vld [vmem:[%s2 + $0x110] sm:$0xff]
  %v962 = vld [vmem:[%s2 + $0x118] sm:$0xff]
  %v963 = vld [vmem:[%s2 + $0x120] sm:$0xff]
  %v964 = vld [vmem:[%s2 + $0x128] sm:$0xff]
  %v965 = vld [vmem:[%s2 + $0x130] sm:$0xff]
  %v966 = vld [vmem:[%s2 + $0x138] sm:$0xff]
  %v967 = vld [vmem:[%s2 + $0x140] sm:$0xff]
  %v968 = vld [vmem:[%s2 + $0x148] sm:$0xff]
  %v969 = vld [vmem:[%s4 + $0xd] sm:$0x1]
  %v970 = vlaneseq
  %v971 = vshrl.u32 %v970, 7
  %v972 = vsub.s32 0, %v971
  %v973 = vrot.slane %v969, %v972
  %974 = vmatprep.subr.mxu0 0.0
  %975 = vmatpush1.msra.mxu0 %v953
  %976 = vmatprep.subr.mxu0 0.0
  %977 = vmatpush1.msra.mxu0 %v954
  %978 = vmatprep.subr.mxu0 0.0
  %979 = vmatpush1.msra.mxu0 %v955
  %980 = vmatprep.subr.mxu0 0.0
  %981 = vmatpush1.msra.mxu0 %v956
  %982 = vmatprep.subr.mxu0 0.0
  %983 = vmatpush1.msra.mxu0 %v957
  %984 = vmatprep.subr.mxu0 0.0
  %985 = vmatpush1.msra.mxu0 %v958
  %986 = vmatprep.subr.mxu0 0.0
  %987 = vmatpush1.msra.mxu0 %v959
  %988 = vmatprep.subr.mxu0 0.0
  %989 = vmatpush1.msra.mxu0 %v960
  %990 = vmatprep.subr.mxu0 0.0
  %991 = vmatpush1.msra.mxu0 %v961
  %992 = vmatprep.subr.mxu0 0.0
  %993 = vmatpush1.msra.mxu0 %v962
  %994 = vmatprep.subr.mxu0 0.0
  %995 = vmatpush1.msra.mxu0 %v963
  %996 = vmatprep.subr.mxu0 0.0
  %997 = vmatpush1.msra.mxu0 %v964
  %998 = vmatprep.subr.mxu0 0.0
  %999 = vmatpush1.msra.mxu0 %v965
  %1000 = vmatprep.subr.mxu0 0.0
  %1001 = vmatpush1.msra.mxu0 %v966
  %1002 = vmatprep.subr.mxu0 0.0
  %1003 = vmatpush1.msra.mxu0 %v967
  %1004 = vmatprep.subr.mxu0 0.0
  %1005 = vmatpush1.msra.mxu0 %v968
  %1006 = vmatprep.subr.mxu0 0.0
  %1007 = vmatpush1.msra.mxu0 0.0
  %1008 = vmatprep.subr.mxu0 0.0
  %1009 = vmatpush1.msra.mxu0 0.0
  %1010 = vmatprep.subr.mxu0 0.0
  %1011 = vmatpush1.msra.mxu0 0.0
  %1012 = vmatprep.subr.mxu0 0.0
  %1013 = vmatpush1.msra.mxu0 0.0
  %1014 = vmatprep.subr.mxu0 0.0
  %1015 = vmatpush1.msra.mxu0 0.0
  %1016 = vmatprep.subr.mxu0 0.0
  %1017 = vmatpush1.msra.mxu0 0.0
  %1018 = vmatprep.subr.mxu0 0.0
  %1019 = vmatpush1.msra.mxu0 0.0
  %1020 = vmatprep.subr.mxu0 0.0
  %1021 = vmatpush1.msra.mxu0 0.0
  %1022 = vmatprep.subr.mxu0 0.0
  %1023 = vmatpush1.msra.mxu0 0.0
  %1024 = vmatprep.subr.mxu0 0.0
  %1025 = vmatpush1.msra.mxu0 0.0
  %1026 = vmatprep.subr.mxu0 0.0
  %1027 = vmatpush1.msra.mxu0 0.0
  %1028 = vmatprep.subr.mxu0 0.0
  %1029 = vmatpush1.msra.mxu0 0.0
  %1030 = vmatprep.subr.mxu0 0.0
  %1031 = vmatpush1.msra.mxu0 0.0
  %1032 = vmatprep.subr.mxu0 0.0
  %1033 = vmatpush1.msra.mxu0 0.0
  %1034 = vmatprep.subr.mxu0 0.0
  %1035 = vmatpush1.msra.mxu0 0.0
  %1036 = vmatprep.subr.mxu0 0.0
  %1037 = vmatpush1.msra.mxu0 0.0
  %1038 = vmatprep.mubr.f32.mxu0 0.0
  %1039 = vmatmul.mubr.f32.gmra.mrb[0].mxu0 %v951
  %v1040 = vpop.f32.mrb[0].mxu0
  %v1041 = vadd.f32 %v973, %v1040
  %v1042 = vpop.f32.mrb[0].mxu0
  %1043 = vmatprep.mubr.f32.mxu0 0.0
  %1044 = vmatmul.mubr.f32.gmra.mrb[0].mxu0 %v952
  %v1045 = vpop.f32.mrb[0].mxu0
  %v1046 = vadd.f32 %v973, %v1045
  %v1047 = vpop.f32.mrb[0].mxu0
  %1048 = vdwg.mxu0
  %v1049 = vadd.f32 %v843, %v1041
  %v1050 = vadd.f32 %v844, %v1046
  %v1051 = vld [vmem:[%s4 + $0xe] sm:$0x1]
  %v1052 = vld [vmem:[%s4 + $0xf] sm:$0x1]
  %v1053 = vsel %vm137, %v1049, 0.0
  %1054 = vadd.xlane.f32.xlu0 %v1053
  %v1055 = vpop.xlane.xlu0 %1054
  %v1056 = vsel %vm137, %v1050, 0.0
  %1057 = vadd.xlane.f32.xlu0 %v1056
  %v1058 = vpop.xlane.xlu0 %1057
  %v1059 = vmul.f32 %v1055, %v144
  %v1060 = vmul.f32 %v1058, %v144
  %v1061 = vsub.f32 %v1049, %v1059
  %v1062 = vsub.f32 %v1050, %v1060
  %v1063 = vmul.f32 %v1061, %v1061
  %v1064 = vmul.f32 %v1062, %v1062
  %v1065 = vsel %vm137, %v1063, 0.0
  %1066 = vadd.xlane.f32.xlu0 %v1065
  %v1067 = vpop.xlane.xlu0 %1066
  %v1068 = vsel %vm137, %v1064, 0.0
  %1069 = vadd.xlane.f32.xlu0 %v1068
  %v1070 = vpop.xlane.xlu0 %1069
  %v1071 = vmul.f32 %v1067, %v144
  %v1072 = vmul.f32 %v1070, %v144
  %v1073 = vadd.f32 %v1071, 1e-12
  %v1074 = vadd.f32 %v1072, 1e-12
  %v1075 = vrsqrt.pop %v1073
  %v1076 = vrsqrt.pop %v1074
  %v1077 = vmul.f32 %v1061, %v1075
  %v1078 = vmul.f32 %v1062, %v1076
  %v1079 = vlaneseq
  %v1080 = vshrl.u32 %v1079, 7
  %v1081 = vsub.s32 0, %v1080
  %v1082 = vrot.slane %v1051, %v1081
  %v1083 = vmul.f32 %v1077, %v1082
  %v1084 = vmul.f32 %v1078, %v1082
  %v1085 = vlaneseq
  %v1086 = vshrl.u32 %v1085, 7
  %v1087 = vsub.s32 0, %v1086
  %v1088 = vrot.slane %v1052, %v1087
  %v1089 = vadd.f32 %v1083, %v1088
  %v1090 = vadd.f32 %v1084, %v1088
  %v1091 = vld [vmem:[%s3 + $0x40] sm:$0xff]
  %v1092 = vld [vmem:[%s3 + $0x48] sm:$0xff]
  %v1093 = vld [vmem:[%s3 + $0x50] sm:$0xff]
  %v1094 = vld [vmem:[%s3 + $0x58] sm:$0xff]
  %v1095 = vld [vmem:[%s4 + $0x10] sm:$0x1]
  %v1096 = vlaneseq
  %v1097 = vshrl.u32 %v1096, 7
  %v1098 = vsub.s32 0, %v1097
  %v1099 = vrot.slane %v1095, %v1098
  %v1101 = vsel %vm137, %v1089, 0
  %v1104 = vsel %vm137, %v1090, 0
  %1106 = vmatprep.subr.mxu0 0.0
  %1107 = vmatpush1.msra.mxu0 %v1091
  %1108 = vmatprep.subr.mxu0 0.0
  %1109 = vmatpush1.msra.mxu0 %v1092
  %1110 = vmatprep.subr.mxu0 0.0
  %1111 = vmatpush1.msra.mxu0 %v1093
  %1112 = vmatprep.subr.mxu0 0.0
  %1113 = vmatpush1.msra.mxu0 %v1094
  %1114 = vmatprep.subr.mxu0 0.0
  %1115 = vmatpush1.msra.mxu0 0.0
  %1116 = vmatprep.subr.mxu0 0.0
  %1117 = vmatpush1.msra.mxu0 0.0
  %1118 = vmatprep.subr.mxu0 0.0
  %1119 = vmatpush1.msra.mxu0 0.0
  %1120 = vmatprep.subr.mxu0 0.0
  %1121 = vmatpush1.msra.mxu0 0.0
  %1122 = vmatprep.subr.mxu0 0.0
  %1123 = vmatpush1.msra.mxu0 0.0
  %1124 = vmatprep.subr.mxu0 0.0
  %1125 = vmatpush1.msra.mxu0 0.0
  %1126 = vmatprep.subr.mxu0 0.0
  %1127 = vmatpush1.msra.mxu0 0.0
  %1128 = vmatprep.subr.mxu0 0.0
  %1129 = vmatpush1.msra.mxu0 0.0
  %1130 = vmatprep.subr.mxu0 0.0
  %1131 = vmatpush1.msra.mxu0 0.0
  %1132 = vmatprep.subr.mxu0 0.0
  %1133 = vmatpush1.msra.mxu0 0.0
  %1134 = vmatprep.subr.mxu0 0.0
  %1135 = vmatpush1.msra.mxu0 0.0
  %1136 = vmatprep.subr.mxu0 0.0
  %1137 = vmatpush1.msra.mxu0 0.0
  %1138 = vmatprep.subr.mxu0 0.0
  %1139 = vmatpush1.msra.mxu0 0.0
  %1140 = vmatprep.subr.mxu0 0.0
  %1141 = vmatpush1.msra.mxu0 0.0
  %1142 = vmatprep.subr.mxu0 0.0
  %1143 = vmatpush1.msra.mxu0 0.0
  %1144 = vmatprep.subr.mxu0 0.0
  %1145 = vmatpush1.msra.mxu0 0.0
  %1146 = vmatprep.subr.mxu0 0.0
  %1147 = vmatpush1.msra.mxu0 0.0
  %1148 = vmatprep.subr.mxu0 0.0
  %1149 = vmatpush1.msra.mxu0 0.0
  %1150 = vmatprep.subr.mxu0 0.0
  %1151 = vmatpush1.msra.mxu0 0.0
  %1152 = vmatprep.subr.mxu0 0.0
  %1153 = vmatpush1.msra.mxu0 0.0
  %1154 = vmatprep.subr.mxu0 0.0
  %1155 = vmatpush1.msra.mxu0 0.0
  %1156 = vmatprep.subr.mxu0 0.0
  %1157 = vmatpush1.msra.mxu0 0.0
  %1158 = vmatprep.subr.mxu0 0.0
  %1159 = vmatpush1.msra.mxu0 0.0
  %1160 = vmatprep.subr.mxu0 0.0
  %1161 = vmatpush1.msra.mxu0 0.0
  %1162 = vmatprep.subr.mxu0 0.0
  %1163 = vmatpush1.msra.mxu0 0.0
  %1164 = vmatprep.subr.mxu0 0.0
  %1165 = vmatpush1.msra.mxu0 0.0
  %1166 = vmatprep.subr.mxu0 0.0
  %1167 = vmatpush1.msra.mxu0 0.0
  %1168 = vmatprep.subr.mxu0 0.0
  %1169 = vmatpush1.msra.mxu0 0.0
  %1170 = vmatprep.mubr.f32.mxu0 0.0
  %1171 = vmatmul.mubr.f32.gmra.mrb[0].mxu0 %v1101
  %v1172 = vpop.f32.mrb[0].mxu0
  %v1173 = vadd.f32 %v1099, %v1172
  %v1174 = vpop.f32.mrb[0].mxu0
  %1175 = vmatprep.mubr.f32.mxu0 0.0
  %1176 = vmatmul.mubr.f32.gmra.mrb[0].mxu0 %v1104
  %v1177 = vpop.f32.mrb[0].mxu0
  %v1178 = vadd.f32 %v1099, %v1177
  %v1179 = vpop.f32.mrb[0].mxu0
  %1180 = vdwg.mxu0
  %1183 = vrot.lane.b32.xlu0 %v1173, 96
  %v1184 = vpop.permute.xlu0 %1183
  %1185 = vrot.lane.b32.xlu0 %v1178, 96
  %v1186 = vpop.permute.xlu0 %1185
  %v1187 = vsel %vm302, %v1173, 0
  %v1189 = vsel %vm302, %v1178, 0
  %v1191 = vsel %vm302, %v1184, 0
  %v1193 = vsel %vm302, %v1186, 0
  %1195 = vmatprep.subr.mxu0 0.0
  %1196 = vmatpush1.xpose.msra.mxu0 %v1191
  %1197 = vmatprep.subr.mxu0 0.0
  %1198 = vmatpush1.xpose.msra.mxu0 %v1193
  %1199 = vmatprep.subr.mxu0 0.0
  %1200 = vmatpush1.xpose.msra.mxu0 0.0
  %1201 = vmatprep.subr.mxu0 0.0
  %1202 = vmatpush1.xpose.msra.mxu0 0.0
  %1203 = vmatprep.subr.mxu0 0.0
  %1204 = vmatpush1.xpose.msra.mxu0 0.0
  %1205 = vmatprep.subr.mxu0 0.0
  %1206 = vmatpush1.xpose.msra.mxu0 0.0
  %1207 = vmatprep.subr.mxu0 0.0
  %1208 = vmatpush1.xpose.msra.mxu0 0.0
  %1209 = vmatprep.subr.mxu0 0.0
  %1210 = vmatpush1.xpose.msra.mxu0 0.0
  %1211 = vmatprep.subr.mxu0 0.0
  %1212 = vmatpush1.xpose.msra.mxu0 0.0
  %1213 = vmatprep.subr.mxu0 0.0
  %1214 = vmatpush1.xpose.msra.mxu0 0.0
  %1215 = vmatprep.subr.mxu0 0.0
  %1216 = vmatpush1.xpose.msra.mxu0 0.0
  %1217 = vmatprep.subr.mxu0 0.0
  %1218 = vmatpush1.xpose.msra.mxu0 0.0
  %1219 = vmatprep.subr.mxu0 0.0
  %1220 = vmatpush1.xpose.msra.mxu0 0.0
  %1221 = vmatprep.subr.mxu0 0.0
  %1222 = vmatpush1.xpose.msra.mxu0 0.0
  %1223 = vmatprep.subr.mxu0 0.0
  %1224 = vmatpush1.xpose.msra.mxu0 0.0
  %1225 = vmatprep.subr.mxu0 0.0
  %1226 = vmatpush1.xpose.msra.mxu0 0.0
  %1227 = vmatprep.subr.mxu0 0.0
  %1228 = vmatpush1.xpose.msra.mxu0 0.0
  %1229 = vmatprep.subr.mxu0 0.0
  %1230 = vmatpush1.xpose.msra.mxu0 0.0
  %1231 = vmatprep.subr.mxu0 0.0
  %1232 = vmatpush1.xpose.msra.mxu0 0.0
  %1233 = vmatprep.subr.mxu0 0.0
  %1234 = vmatpush1.xpose.msra.mxu0 0.0
  %1235 = vmatprep.subr.mxu0 0.0
  %1236 = vmatpush1.xpose.msra.mxu0 0.0
  %1237 = vmatprep.subr.mxu0 0.0
  %1238 = vmatpush1.xpose.msra.mxu0 0.0
  %1239 = vmatprep.subr.mxu0 0.0
  %1240 = vmatpush1.xpose.msra.mxu0 0.0
  %1241 = vmatprep.subr.mxu0 0.0
  %1242 = vmatpush1.xpose.msra.mxu0 0.0
  %1243 = vmatprep.subr.mxu0 0.0
  %1244 = vmatpush1.xpose.msra.mxu0 0.0
  %1245 = vmatprep.subr.mxu0 0.0
  %1246 = vmatpush1.xpose.msra.mxu0 0.0
  %1247 = vmatprep.subr.mxu0 0.0
  %1248 = vmatpush1.xpose.msra.mxu0 0.0
  %1249 = vmatprep.subr.mxu0 0.0
  %1250 = vmatpush1.xpose.msra.mxu0 0.0
  %1251 = vmatprep.subr.mxu0 0.0
  %1252 = vmatpush1.xpose.msra.mxu0 0.0
  %1253 = vmatprep.subr.mxu0 0.0
  %1254 = vmatpush1.xpose.msra.mxu0 0.0
  %1255 = vmatprep.subr.mxu0 0.0
  %1256 = vmatpush1.xpose.msra.mxu0 0.0
  %1257 = vmatprep.subr.mxu0 0.0
  %1258 = vmatpush1.xpose.msra.mxu0 0.0
  %1259 = vmatprep.mubr.f32.mxu0 0.0
  %1260 = vmatmul.mubr.f32.gmra.mrb[0].mxu0 %v1187
  %v1261 = vpop.f32.mrb[0].mxu0
  %v1262 = vadd.f32 0.0, %v1261
  %v1263 = vpop.f32.mrb[0].mxu0
  %1264 = vmatprep.mubr.f32.mxu0 0.0
  %1265 = vmatmul.mubr.f32.gmra.mrb[0].mxu0 %v1189
  %v1266 = vpop.f32.mrb[0].mxu0
  %v1267 = vadd.f32 0.0, %v1266
  %v1268 = vpop.f32.mrb[0].mxu0
  %1269 = vdwg.mxu0
  %v1270 = vmul.f32 %v1262, 0.25
  %v1271 = vmul.f32 %v1267, 0.25
  %v1272 = vadd.f32 %v1270, %v204
  %v1273 = vadd.f32 %v1271, %v205
  %v1274 = vsel %vm302, %v1272, -inf
  %1275 = vmax.xlane.f32.xlu0 %v1274
  %v1276 = vpop.xlane.xlu0 %1275
  %v1277 = vsel %vm302, %v1273, -inf
  %1278 = vmax.xlane.f32.xlu0 %v1277
  %v1279 = vpop.xlane.xlu0 %1278
  %v1280 = vsub.f32 %v1272, %v1276
  %v1281 = vsub.f32 %v1273, %v1279
  %v1282 = vmul.f32 %v1280, 1.442695
  %v1283 = vpow.pop %v1282
  %v1284 = vmul.f32 %v1281, 1.442695
  %v1285 = vpow.pop %v1284
  %v1286 = vsel %vm302, %v1283, 0.0
  %1287 = vadd.xlane.f32.xlu0 %v1286
  %v1288 = vpop.xlane.xlu0 %1287
  %v1289 = vsel %vm302, %v1285, 0.0
  %1290 = vadd.xlane.f32.xlu0 %v1289
  %v1291 = vpop.xlane.xlu0 %1290
  %v1292 = vrcp.pop %v1288
  %v1293 = vrcp.pop %v1291
  %v1294 = vmul.f32 %v1283, %v1292
  %v1295 = vmul.f32 %v1285, %v1293
  %1296 = vrot.lane.b32.xlu0 %v1173, 64
  %v1297 = vpop.permute.xlu0 %1296
  %1298 = vrot.lane.b32.xlu0 %v1178, 64
  %v1299 = vpop.permute.xlu0 %1298
  %v1303 = vsel %vm302, %v1294, 0
  %v1306 = vsel %vm302, %v1295, 0
  %1308 = vmatprep.subr.mxu0 0.0
  %1309 = vmatpush1.msra.mxu0 %v1297
  %1310 = vmatprep.subr.mxu0 0.0
  %1311 = vmatpush1.msra.mxu0 %v1299
  %1312 = vmatprep.subr.mxu0 0.0
  %1313 = vmatpush1.msra.mxu0 0.0
  %1314 = vmatprep.subr.mxu0 0.0
  %1315 = vmatpush1.msra.mxu0 0.0
  %1316 = vmatprep.subr.mxu0 0.0
  %1317 = vmatpush1.msra.mxu0 0.0
  %1318 = vmatprep.subr.mxu0 0.0
  %1319 = vmatpush1.msra.mxu0 0.0
  %1320 = vmatprep.subr.mxu0 0.0
  %1321 = vmatpush1.msra.mxu0 0.0
  %1322 = vmatprep.subr.mxu0 0.0
  %1323 = vmatpush1.msra.mxu0 0.0
  %1324 = vmatprep.subr.mxu0 0.0
  %1325 = vmatpush1.msra.mxu0 0.0
  %1326 = vmatprep.subr.mxu0 0.0
  %1327 = vmatpush1.msra.mxu0 0.0
  %1328 = vmatprep.subr.mxu0 0.0
  %1329 = vmatpush1.msra.mxu0 0.0
  %1330 = vmatprep.subr.mxu0 0.0
  %1331 = vmatpush1.msra.mxu0 0.0
  %1332 = vmatprep.subr.mxu0 0.0
  %1333 = vmatpush1.msra.mxu0 0.0
  %1334 = vmatprep.subr.mxu0 0.0
  %1335 = vmatpush1.msra.mxu0 0.0
  %1336 = vmatprep.subr.mxu0 0.0
  %1337 = vmatpush1.msra.mxu0 0.0
  %1338 = vmatprep.subr.mxu0 0.0
  %1339 = vmatpush1.msra.mxu0 0.0
  %1340 = vmatprep.subr.mxu0 0.0
  %1341 = vmatpush1.msra.mxu0 0.0
  %1342 = vmatprep.subr.mxu0 0.0
  %1343 = vmatpush1.msra.mxu0 0.0
  %1344 = vmatprep.subr.mxu0 0.0
  %1345 = vmatpush1.msra.mxu0 0.0
  %1346 = vmatprep.subr.mxu0 0.0
  %1347 = vmatpush1.msra.mxu0 0.0
  %1348 = vmatprep.subr.mxu0 0.0
  %1349 = vmatpush1.msra.mxu0 0.0
  %1350 = vmatprep.subr.mxu0 0.0
  %1351 = vmatpush1.msra.mxu0 0.0
  %1352 = vmatprep.subr.mxu0 0.0
  %1353 = vmatpush1.msra.mxu0 0.0
  %1354 = vmatprep.subr.mxu0 0.0
  %1355 = vmatpush1.msra.mxu0 0.0
  %1356 = vmatprep.subr.mxu0 0.0
  %1357 = vmatpush1.msra.mxu0 0.0
  %1358 = vmatprep.subr.mxu0 0.0
  %1359 = vmatpush1.msra.mxu0 0.0
  %1360 = vmatprep.subr.mxu0 0.0
  %1361 = vmatpush1.msra.mxu0 0.0
  %1362 = vmatprep.subr.mxu0 0.0
  %1363 = vmatpush1.msra.mxu0 0.0
  %1364 = vmatprep.subr.mxu0 0.0
  %1365 = vmatpush1.msra.mxu0 0.0
  %1366 = vmatprep.subr.mxu0 0.0
  %1367 = vmatpush1.msra.mxu0 0.0
  %1368 = vmatprep.subr.mxu0 0.0
  %1369 = vmatpush1.msra.mxu0 0.0
  %1370 = vmatprep.subr.mxu0 0.0
  %1371 = vmatpush1.msra.mxu0 0.0
  %1372 = vmatprep.mubr.f32.mxu0 0.0
  %1373 = vmatmul.mubr.f32.gmra.mrb[0].mxu0 %v1303
  %v1374 = vpop.f32.mrb[0].mxu0
  %v1375 = vadd.f32 0.0, %v1374
  %v1376 = vpop.f32.mrb[0].mxu0
  %1377 = vmatprep.mubr.f32.mxu0 0.0
  %1378 = vmatmul.mubr.f32.gmra.mrb[0].mxu0 %v1306
  %v1379 = vpop.f32.mrb[0].mxu0
  %v1380 = vadd.f32 0.0, %v1379
  %v1381 = vpop.f32.mrb[0].mxu0
  %1382 = vdwg.mxu0
  %1383 = vrot.lane.b32.xlu0 %v1173, 112
  %v1384 = vpop.permute.xlu0 %1383
  %1385 = vrot.lane.b32.xlu0 %v1178, 112
  %v1386 = vpop.permute.xlu0 %1385
  %1387 = vrot.lane.b32.xlu0 %v1173, 80
  %v1388 = vpop.permute.xlu0 %1387
  %1389 = vrot.lane.b32.xlu0 %v1178, 80
  %v1390 = vpop.permute.xlu0 %1389
  %v1391 = vsel %vm302, %v1384, 0
  %v1393 = vsel %vm302, %v1386, 0
  %v1395 = vsel %vm302, %v1388, 0
  %v1397 = vsel %vm302, %v1390, 0
  %1399 = vmatprep.subr.mxu0 0.0
  %1400 = vmatpush1.xpose.msra.mxu0 %v1395
  %1401 = vmatprep.subr.mxu0 0.0
  %1402 = vmatpush1.xpose.msra.mxu0 %v1397
  %1403 = vmatprep.subr.mxu0 0.0
  %1404 = vmatpush1.xpose.msra.mxu0 0.0
  %1405 = vmatprep.subr.mxu0 0.0
  %1406 = vmatpush1.xpose.msra.mxu0 0.0
  %1407 = vmatprep.subr.mxu0 0.0
  %1408 = vmatpush1.xpose.msra.mxu0 0.0
  %1409 = vmatprep.subr.mxu0 0.0
  %1410 = vmatpush1.xpose.msra.mxu0 0.0
  %1411 = vmatprep.subr.mxu0 0.0
  %1412 = vmatpush1.xpose.msra.mxu0 0.0
  %1413 = vmatprep.subr.mxu0 0.0
  %1414 = vmatpush1.xpose.msra.mxu0 0.0
  %1415 = vmatprep.subr.mxu0 0.0
  %1416 = vmatpush1.xpose.msra.mxu0 0.0
  %1417 = vmatprep.subr.mxu0 0.0
  %1418 = vmatpush1.xpose.msra.mxu0 0.0
  %1419 = vmatprep.subr.mxu0 0.0
  %1420 = vmatpush1.xpose.msra.mxu0 0.0
  %1421 = vmatprep.subr.mxu0 0.0
  %1422 = vmatpush1.xpose.msra.mxu0 0.0
  %1423 = vmatprep.subr.mxu0 0.0
  %1424 = vmatpush1.xpose.msra.mxu0 0.0
  %1425 = vmatprep.subr.mxu0 0.0
  %1426 = vmatpush1.xpose.msra.mxu0 0.0
  %1427 = vmatprep.subr.mxu0 0.0
  %1428 = vmatpush1.xpose.msra.mxu0 0.0
  %1429 = vmatprep.subr.mxu0 0.0
  %1430 = vmatpush1.xpose.msra.mxu0 0.0
  %1431 = vmatprep.subr.mxu0 0.0
  %1432 = vmatpush1.xpose.msra.mxu0 0.0
  %1433 = vmatprep.subr.mxu0 0.0
  %1434 = vmatpush1.xpose.msra.mxu0 0.0
  %1435 = vmatprep.subr.mxu0 0.0
  %1436 = vmatpush1.xpose.msra.mxu0 0.0
  %1437 = vmatprep.subr.mxu0 0.0
  %1438 = vmatpush1.xpose.msra.mxu0 0.0
  %1439 = vmatprep.subr.mxu0 0.0
  %1440 = vmatpush1.xpose.msra.mxu0 0.0
  %1441 = vmatprep.subr.mxu0 0.0
  %1442 = vmatpush1.xpose.msra.mxu0 0.0
  %1443 = vmatprep.subr.mxu0 0.0
  %1444 = vmatpush1.xpose.msra.mxu0 0.0
  %1445 = vmatprep.subr.mxu0 0.0
  %1446 = vmatpush1.xpose.msra.mxu0 0.0
  %1447 = vmatprep.subr.mxu0 0.0
  %1448 = vmatpush1.xpose.msra.mxu0 0.0
  %1449 = vmatprep.subr.mxu0 0.0
  %1450 = vmatpush1.xpose.msra.mxu0 0.0
  %1451 = vmatprep.subr.mxu0 0.0
  %1452 = vmatpush1.xpose.msra.mxu0 0.0
  %1453 = vmatprep.subr.mxu0 0.0
  %1454 = vmatpush1.xpose.msra.mxu0 0.0
  %1455 = vmatprep.subr.mxu0 0.0
  %1456 = vmatpush1.xpose.msra.mxu0 0.0
  %1457 = vmatprep.subr.mxu0 0.0
  %1458 = vmatpush1.xpose.msra.mxu0 0.0
  %1459 = vmatprep.subr.mxu0 0.0
  %1460 = vmatpush1.xpose.msra.mxu0 0.0
  %1461 = vmatprep.subr.mxu0 0.0
  %1462 = vmatpush1.xpose.msra.mxu0 0.0
  %1463 = vmatprep.mubr.f32.mxu0 0.0
  %1464 = vmatmul.mubr.f32.gmra.mrb[0].mxu0 %v1391
  %v1465 = vpop.f32.mrb[0].mxu0
  %v1466 = vadd.f32 0.0, %v1465
  %v1467 = vpop.f32.mrb[0].mxu0
  %1468 = vmatprep.mubr.f32.mxu0 0.0
  %1469 = vmatmul.mubr.f32.gmra.mrb[0].mxu0 %v1393
  %v1470 = vpop.f32.mrb[0].mxu0
  %v1471 = vadd.f32 0.0, %v1470
  %v1472 = vpop.f32.mrb[0].mxu0
  %1473 = vdwg.mxu0
  %v1474 = vmul.f32 %v1466, 0.25
  %v1475 = vmul.f32 %v1471, 0.25
  %v1476 = vadd.f32 %v1474, %v204
  %v1477 = vadd.f32 %v1475, %v205
  %v1478 = vsel %vm302, %v1476, -inf
  %1479 = vmax.xlane.f32.xlu0 %v1478
  %v1480 = vpop.xlane.xlu0 %1479
  %v1481 = vsel %vm302, %v1477, -inf
  %1482 = vmax.xlane.f32.xlu0 %v1481
  %v1483 = vpop.xlane.xlu0 %1482
  %v1484 = vsub.f32 %v1476, %v1480
  %v1485 = vsub.f32 %v1477, %v1483
  %v1486 = vmul.f32 %v1484, 1.442695
  %v1487 = vpow.pop %v1486
  %v1488 = vmul.f32 %v1485, 1.442695
  %v1489 = vpow.pop %v1488
  %v1490 = vsel %vm302, %v1487, 0.0
  %1491 = vadd.xlane.f32.xlu0 %v1490
  %v1492 = vpop.xlane.xlu0 %1491
  %v1493 = vsel %vm302, %v1489, 0.0
  %1494 = vadd.xlane.f32.xlu0 %v1493
  %v1495 = vpop.xlane.xlu0 %1494
  %v1496 = vrcp.pop %v1492
  %v1497 = vrcp.pop %v1495
  %v1498 = vmul.f32 %v1487, %v1496
  %v1499 = vmul.f32 %v1489, %v1497
  %1500 = vrot.lane.b32.xlu0 %v1173, 48
  %v1501 = vpop.permute.xlu0 %1500
  %1502 = vrot.lane.b32.xlu0 %v1178, 48
  %v1503 = vpop.permute.xlu0 %1502
  %v1507 = vsel %vm302, %v1498, 0
  %v1510 = vsel %vm302, %v1499, 0
  %1512 = vmatprep.subr.mxu0 0.0
  %1513 = vmatpush1.msra.mxu0 %v1501
  %1514 = vmatprep.subr.mxu0 0.0
  %1515 = vmatpush1.msra.mxu0 %v1503
  %1516 = vmatprep.subr.mxu0 0.0
  %1517 = vmatpush1.msra.mxu0 0.0
  %1518 = vmatprep.subr.mxu0 0.0
  %1519 = vmatpush1.msra.mxu0 0.0
  %1520 = vmatprep.subr.mxu0 0.0
  %1521 = vmatpush1.msra.mxu0 0.0
  %1522 = vmatprep.subr.mxu0 0.0
  %1523 = vmatpush1.msra.mxu0 0.0
  %1524 = vmatprep.subr.mxu0 0.0
  %1525 = vmatpush1.msra.mxu0 0.0
  %1526 = vmatprep.subr.mxu0 0.0
  %1527 = vmatpush1.msra.mxu0 0.0
  %1528 = vmatprep.subr.mxu0 0.0
  %1529 = vmatpush1.msra.mxu0 0.0
  %1530 = vmatprep.subr.mxu0 0.0
  %1531 = vmatpush1.msra.mxu0 0.0
  %1532 = vmatprep.subr.mxu0 0.0
  %1533 = vmatpush1.msra.mxu0 0.0
  %1534 = vmatprep.subr.mxu0 0.0
  %1535 = vmatpush1.msra.mxu0 0.0
  %1536 = vmatprep.subr.mxu0 0.0
  %1537 = vmatpush1.msra.mxu0 0.0
  %1538 = vmatprep.subr.mxu0 0.0
  %1539 = vmatpush1.msra.mxu0 0.0
  %1540 = vmatprep.subr.mxu0 0.0
  %1541 = vmatpush1.msra.mxu0 0.0
  %1542 = vmatprep.subr.mxu0 0.0
  %1543 = vmatpush1.msra.mxu0 0.0
  %1544 = vmatprep.subr.mxu0 0.0
  %1545 = vmatpush1.msra.mxu0 0.0
  %1546 = vmatprep.subr.mxu0 0.0
  %1547 = vmatpush1.msra.mxu0 0.0
  %1548 = vmatprep.subr.mxu0 0.0
  %1549 = vmatpush1.msra.mxu0 0.0
  %1550 = vmatprep.subr.mxu0 0.0
  %1551 = vmatpush1.msra.mxu0 0.0
  %1552 = vmatprep.subr.mxu0 0.0
  %1553 = vmatpush1.msra.mxu0 0.0
  %1554 = vmatprep.subr.mxu0 0.0
  %1555 = vmatpush1.msra.mxu0 0.0
  %1556 = vmatprep.subr.mxu0 0.0
  %1557 = vmatpush1.msra.mxu0 0.0
  %1558 = vmatprep.subr.mxu0 0.0
  %1559 = vmatpush1.msra.mxu0 0.0
  %1560 = vmatprep.subr.mxu0 0.0
  %1561 = vmatpush1.msra.mxu0 0.0
  %1562 = vmatprep.subr.mxu0 0.0
  %1563 = vmatpush1.msra.mxu0 0.0
  %1564 = vmatprep.subr.mxu0 0.0
  %1565 = vmatpush1.msra.mxu0 0.0
  %1566 = vmatprep.subr.mxu0 0.0
  %1567 = vmatpush1.msra.mxu0 0.0
  %1568 = vmatprep.subr.mxu0 0.0
  %1569 = vmatpush1.msra.mxu0 0.0
  %1570 = vmatprep.subr.mxu0 0.0
  %1571 = vmatpush1.msra.mxu0 0.0
  %1572 = vmatprep.subr.mxu0 0.0
  %1573 = vmatpush1.msra.mxu0 0.0
  %1574 = vmatprep.subr.mxu0 0.0
  %1575 = vmatpush1.msra.mxu0 0.0
  %1576 = vmatprep.mubr.f32.mxu0 0.0
  %1577 = vmatmul.mubr.f32.gmra.mrb[0].mxu0 %v1507
  %v1578 = vpop.f32.mrb[0].mxu0
  %v1579 = vadd.f32 0.0, %v1578
  %v1580 = vpop.f32.mrb[0].mxu0
  %1581 = vmatprep.mubr.f32.mxu0 0.0
  %1582 = vmatmul.mubr.f32.gmra.mrb[0].mxu0 %v1510
  %v1583 = vpop.f32.mrb[0].mxu0
  %v1584 = vadd.f32 0.0, %v1583
  %v1585 = vpop.f32.mrb[0].mxu0
  %1586 = vdwg.mxu0
  %1589 = vrot.lane.b32.xlu0 %v1579, 16
  %v1590 = vpop.permute.xlu0 %1589
  %1591 = vrot.lane.b32.xlu0 %v1584, 16
  %v1592 = vpop.permute.xlu0 %1591
  %v1595 = vsel %vm302, %v1375, %v1590
  %v1596 = vsel %vm302, %v1380, %v1592
  %v1597 = vld [vmem:[%s2 + $0x150] sm:$0xff]
  %v1598 = vld [vmem:[%s2 + $0x158] sm:$0xff]
  %v1599 = vld [vmem:[%s2 + $0x160] sm:$0xff]
  %v1600 = vld [vmem:[%s2 + $0x168] sm:$0xff]
  %v1601 = vld [vmem:[%s4 + $0x11] sm:$0x1]
  %v1602 = vlaneseq
  %v1603 = vshrl.u32 %v1602, 7
  %v1604 = vsub.s32 0, %v1603
  %v1605 = vrot.slane %v1601, %v1604
  %v1607 = vsel %vm137, %v1595, 0
  %v1610 = vsel %vm137, %v1596, 0
  %1612 = vmatprep.subr.mxu0 0.0
  %1613 = vmatpush1.msra.mxu0 %v1597
  %1614 = vmatprep.subr.mxu0 0.0
  %1615 = vmatpush1.msra.mxu0 %v1598
  %1616 = vmatprep.subr.mxu0 0.0
  %1617 = vmatpush1.msra.mxu0 %v1599
  %1618 = vmatprep.subr.mxu0 0.0
  %1619 = vmatpush1.msra.mxu0 %v1600
  %1620 = vmatprep.subr.mxu0 0.0
  %1621 = vmatpush1.msra.mxu0 0.0
  %1622 = vmatprep.subr.mxu0 0.0
  %1623 = vmatpush1.msra.mxu0 0.0
  %1624 = vmatprep.subr.mxu0 0.0
  %1625 = vmatpush1.msra.mxu0 0.0
  %1626 = vmatprep.subr.mxu0 0.0
  %1627 = vmatpush1.msra.mxu0 0.0
  %1628 = vmatprep.subr.mxu0 0.0
  %1629 = vmatpush1.msra.mxu0 0.0
  %1630 = vmatprep.subr.mxu0 0.0
  %1631 = vmatpush1.msra.mxu0 0.0
  %1632 = vmatprep.subr.mxu0 0.0
  %1633 = vmatpush1.msra.mxu0 0.0
  %1634 = vmatprep.subr.mxu0 0.0
  %1635 = vmatpush1.msra.mxu0 0.0
  %1636 = vmatprep.subr.mxu0 0.0
  %1637 = vmatpush1.msra.mxu0 0.0
  %1638 = vmatprep.subr.mxu0 0.0
  %1639 = vmatpush1.msra.mxu0 0.0
  %1640 = vmatprep.subr.mxu0 0.0
  %1641 = vmatpush1.msra.mxu0 0.0
  %1642 = vmatprep.subr.mxu0 0.0
  %1643 = vmatpush1.msra.mxu0 0.0
  %1644 = vmatprep.subr.mxu0 0.0
  %1645 = vmatpush1.msra.mxu0 0.0
  %1646 = vmatprep.subr.mxu0 0.0
  %1647 = vmatpush1.msra.mxu0 0.0
  %1648 = vmatprep.subr.mxu0 0.0
  %1649 = vmatpush1.msra.mxu0 0.0
  %1650 = vmatprep.subr.mxu0 0.0
  %1651 = vmatpush1.msra.mxu0 0.0
  %1652 = vmatprep.subr.mxu0 0.0
  %1653 = vmatpush1.msra.mxu0 0.0
  %1654 = vmatprep.subr.mxu0 0.0
  %1655 = vmatpush1.msra.mxu0 0.0
  %1656 = vmatprep.subr.mxu0 0.0
  %1657 = vmatpush1.msra.mxu0 0.0
  %1658 = vmatprep.subr.mxu0 0.0
  %1659 = vmatpush1.msra.mxu0 0.0
  %1660 = vmatprep.subr.mxu0 0.0
  %1661 = vmatpush1.msra.mxu0 0.0
  %1662 = vmatprep.subr.mxu0 0.0
  %1663 = vmatpush1.msra.mxu0 0.0
  %1664 = vmatprep.subr.mxu0 0.0
  %1665 = vmatpush1.msra.mxu0 0.0
  %1666 = vmatprep.subr.mxu0 0.0
  %1667 = vmatpush1.msra.mxu0 0.0
  %1668 = vmatprep.subr.mxu0 0.0
  %1669 = vmatpush1.msra.mxu0 0.0
  %1670 = vmatprep.subr.mxu0 0.0
  %1671 = vmatpush1.msra.mxu0 0.0
  %1672 = vmatprep.subr.mxu0 0.0
  %1673 = vmatpush1.msra.mxu0 0.0
  %1674 = vmatprep.subr.mxu0 0.0
  %1675 = vmatpush1.msra.mxu0 0.0
  %1676 = vmatprep.mubr.f32.mxu0 0.0
  %1677 = vmatmul.mubr.f32.gmra.mrb[0].mxu0 %v1607
  %v1678 = vpop.f32.mrb[0].mxu0
  %v1679 = vadd.f32 %v1605, %v1678
  %v1680 = vpop.f32.mrb[0].mxu0
  %1681 = vmatprep.mubr.f32.mxu0 0.0
  %1682 = vmatmul.mubr.f32.gmra.mrb[0].mxu0 %v1610
  %v1683 = vpop.f32.mrb[0].mxu0
  %v1684 = vadd.f32 %v1605, %v1683
  %v1685 = vpop.f32.mrb[0].mxu0
  %1686 = vdwg.mxu0
  %v1687 = vadd.f32 %v1089, %v1679
  %v1688 = vadd.f32 %v1090, %v1684
  %v1689 = vld [vmem:[%s4 + $0x12] sm:$0x1]
  %v1690 = vld [vmem:[%s4 + $0x13] sm:$0x1]
  %v1691 = vsel %vm137, %v1687, 0.0
  %1692 = vadd.xlane.f32.xlu0 %v1691
  %v1693 = vpop.xlane.xlu0 %1692
  %v1694 = vsel %vm137, %v1688, 0.0
  %1695 = vadd.xlane.f32.xlu0 %v1694
  %v1696 = vpop.xlane.xlu0 %1695
  %v1697 = vmul.f32 %v1693, %v144
  %v1698 = vmul.f32 %v1696, %v144
  %v1699 = vsub.f32 %v1687, %v1697
  %v1700 = vsub.f32 %v1688, %v1698
  %v1701 = vmul.f32 %v1699, %v1699
  %v1702 = vmul.f32 %v1700, %v1700
  %v1703 = vsel %vm137, %v1701, 0.0
  %1704 = vadd.xlane.f32.xlu0 %v1703
  %v1705 = vpop.xlane.xlu0 %1704
  %v1706 = vsel %vm137, %v1702, 0.0
  %1707 = vadd.xlane.f32.xlu0 %v1706
  %v1708 = vpop.xlane.xlu0 %1707
  %v1709 = vmul.f32 %v1705, %v144
  %v1710 = vmul.f32 %v1708, %v144
  %v1711 = vadd.f32 %v1709, 1e-12
  %v1712 = vadd.f32 %v1710, 1e-12
  %v1713 = vrsqrt.pop %v1711
  %v1714 = vrsqrt.pop %v1712
  %v1715 = vmul.f32 %v1699, %v1713
  %v1716 = vmul.f32 %v1700, %v1714
  %v1717 = vlaneseq
  %v1718 = vshrl.u32 %v1717, 7
  %v1719 = vsub.s32 0, %v1718
  %v1720 = vrot.slane %v1689, %v1719
  %v1721 = vmul.f32 %v1715, %v1720
  %v1722 = vmul.f32 %v1716, %v1720
  %v1723 = vlaneseq
  %v1724 = vshrl.u32 %v1723, 7
  %v1725 = vsub.s32 0, %v1724
  %v1726 = vrot.slane %v1690, %v1725
  %v1727 = vadd.f32 %v1721, %v1726
  %v1728 = vadd.f32 %v1722, %v1726
  %v1729 = vld [vmem:[%s3 + $0x60] sm:$0xff]
  %v1730 = vld [vmem:[%s3 + $0x68] sm:$0xff]
  %v1731 = vld [vmem:[%s3 + $0x70] sm:$0xff]
  %v1732 = vld [vmem:[%s3 + $0x78] sm:$0xff]
  %v1733 = vld [vmem:[%s4 + $0x14] sm:$0x1]
  %v1734 = vlaneseq
  %v1735 = vshrl.u32 %v1734, 7
  %v1736 = vsub.s32 0, %v1735
  %v1737 = vrot.slane %v1733, %v1736
  %v1739 = vsel %vm137, %v1727, 0
  %v1742 = vsel %vm137, %v1728, 0
  %1744 = vmatprep.subr.mxu0 0.0
  %1745 = vmatpush1.msra.mxu0 %v1729
  %1746 = vmatprep.subr.mxu0 0.0
  %1747 = vmatpush1.msra.mxu0 %v1730
  %1748 = vmatprep.subr.mxu0 0.0
  %1749 = vmatpush1.msra.mxu0 %v1731
  %1750 = vmatprep.subr.mxu0 0.0
  %1751 = vmatpush1.msra.mxu0 %v1732
  %1752 = vmatprep.subr.mxu0 0.0
  %1753 = vmatpush1.msra.mxu0 0.0
  %1754 = vmatprep.subr.mxu0 0.0
  %1755 = vmatpush1.msra.mxu0 0.0
  %1756 = vmatprep.subr.mxu0 0.0
  %1757 = vmatpush1.msra.mxu0 0.0
  %1758 = vmatprep.subr.mxu0 0.0
  %1759 = vmatpush1.msra.mxu0 0.0
  %1760 = vmatprep.subr.mxu0 0.0
  %1761 = vmatpush1.msra.mxu0 0.0
  %1762 = vmatprep.subr.mxu0 0.0
  %1763 = vmatpush1.msra.mxu0 0.0
  %1764 = vmatprep.subr.mxu0 0.0
  %1765 = vmatpush1.msra.mxu0 0.0
  %1766 = vmatprep.subr.mxu0 0.0
  %1767 = vmatpush1.msra.mxu0 0.0
  %1768 = vmatprep.subr.mxu0 0.0
  %1769 = vmatpush1.msra.mxu0 0.0
  %1770 = vmatprep.subr.mxu0 0.0
  %1771 = vmatpush1.msra.mxu0 0.0
  %1772 = vmatprep.subr.mxu0 0.0
  %1773 = vmatpush1.msra.mxu0 0.0
  %1774 = vmatprep.subr.mxu0 0.0
  %1775 = vmatpush1.msra.mxu0 0.0
  %1776 = vmatprep.subr.mxu0 0.0
  %1777 = vmatpush1.msra.mxu0 0.0
  %1778 = vmatprep.subr.mxu0 0.0
  %1779 = vmatpush1.msra.mxu0 0.0
  %1780 = vmatprep.subr.mxu0 0.0
  %1781 = vmatpush1.msra.mxu0 0.0
  %1782 = vmatprep.subr.mxu0 0.0
  %1783 = vmatpush1.msra.mxu0 0.0
  %1784 = vmatprep.subr.mxu0 0.0
  %1785 = vmatpush1.msra.mxu0 0.0
  %1786 = vmatprep.subr.mxu0 0.0
  %1787 = vmatpush1.msra.mxu0 0.0
  %1788 = vmatprep.subr.mxu0 0.0
  %1789 = vmatpush1.msra.mxu0 0.0
  %1790 = vmatprep.subr.mxu0 0.0
  %1791 = vmatpush1.msra.mxu0 0.0
  %1792 = vmatprep.subr.mxu0 0.0
  %1793 = vmatpush1.msra.mxu0 0.0
  %1794 = vmatprep.subr.mxu0 0.0
  %1795 = vmatpush1.msra.mxu0 0.0
  %1796 = vmatprep.subr.mxu0 0.0
  %1797 = vmatpush1.msra.mxu0 0.0
  %1798 = vmatprep.subr.mxu0 0.0
  %1799 = vmatpush1.msra.mxu0 0.0
  %1800 = vmatprep.subr.mxu0 0.0
  %1801 = vmatpush1.msra.mxu0 0.0
  %1802 = vmatprep.subr.mxu0 0.0
  %1803 = vmatpush1.msra.mxu0 0.0
  %1804 = vmatprep.subr.mxu0 0.0
  %1805 = vmatpush1.msra.mxu0 0.0
  %1806 = vmatprep.subr.mxu0 0.0
  %1807 = vmatpush1.msra.mxu0 0.0
  %1808 = vmatprep.mubr.f32.mxu0 0.0
  %1809 = vmatmul.mubr.f32.gmra.mrb[0].mxu0 %v1739
  %v1810 = vpop.f32.mrb[0].mxu0
  %v1811 = vadd.f32 %v1737, %v1810
  %v1812 = vpop.f32.mrb[0].mxu0
  %1813 = vmatprep.mubr.f32.mxu0 0.0
  %1814 = vmatmul.mubr.f32.gmra.mrb[0].mxu0 %v1742
  %v1815 = vpop.f32.mrb[0].mxu0
  %v1816 = vadd.f32 %v1737, %v1815
  %v1817 = vpop.f32.mrb[0].mxu0
  %1818 = vdwg.mxu0
  %v1819 = vmul.f32 %v1811, 0.5
  %v1820 = vmul.f32 %v1816, 0.5
  %v1821 = vmul.f32 %v1811, 0.044715
  %v1822 = vmul.f32 %v1816, 0.044715
  %v1823 = vmul.f32 %v1821, %v1811
  %v1824 = vmul.f32 %v1822, %v1816
  %v1825 = vmul.f32 %v1823, %v1811
  %v1826 = vmul.f32 %v1824, %v1816
  %v1827 = vadd.f32 %v1811, %v1825
  %v1828 = vadd.f32 %v1816, %v1826
  %v1829 = vmul.f32 %v1827, 0.7978846
  %v1830 = vmul.f32 %v1828, 0.7978846
  %v1831 = vtanh.pop %v1829
  %v1832 = vtanh.pop %v1830
  %v1833 = vadd.f32 %v1831, 1.0
  %v1834 = vadd.f32 %v1832, 1.0
  %v1835 = vmul.f32 %v1819, %v1833
  %v1836 = vmul.f32 %v1820, %v1834
  %v1837 = vld [vmem:[%s2 + $0x170] sm:$0xff]
  %v1838 = vld [vmem:[%s2 + $0x178] sm:$0xff]
  %v1839 = vld [vmem:[%s2 + $0x180] sm:$0xff]
  %v1840 = vld [vmem:[%s2 + $0x188] sm:$0xff]
  %v1841 = vld [vmem:[%s2 + $0x190] sm:$0xff]
  %v1842 = vld [vmem:[%s2 + $0x198] sm:$0xff]
  %v1843 = vld [vmem:[%s2 + $0x1a0] sm:$0xff]
  %v1844 = vld [vmem:[%s2 + $0x1a8] sm:$0xff]
  %v1845 = vld [vmem:[%s2 + $0x1b0] sm:$0xff]
  %v1846 = vld [vmem:[%s2 + $0x1b8] sm:$0xff]
  %v1847 = vld [vmem:[%s2 + $0x1c0] sm:$0xff]
  %v1848 = vld [vmem:[%s2 + $0x1c8] sm:$0xff]
  %v1849 = vld [vmem:[%s2 + $0x1d0] sm:$0xff]
  %v1850 = vld [vmem:[%s2 + $0x1d8] sm:$0xff]
  %v1851 = vld [vmem:[%s2 + $0x1e0] sm:$0xff]
  %v1852 = vld [vmem:[%s2 + $0x1e8] sm:$0xff]
  %v1853 = vld [vmem:[%s4 + $0x15] sm:$0x1]
  %v1854 = vlaneseq
  %v1855 = vshrl.u32 %v1854, 7
  %v1856 = vsub.s32 0, %v1855
  %v1857 = vrot.slane %v1853, %v1856
  %1858 = vmatprep.subr.mxu0 0.0
  %1859 = vmatpush1.msra.mxu0 %v1837
  %1860 = vmatprep.subr.mxu0 0.0
  %1861 = vmatpush1.msra.mxu0 %v1838
  %1862 = vmatprep.subr.mxu0 0.0
  %1863 = vmatpush1.msra.mxu0 %v1839
  %1864 = vmatprep.subr.mxu0 0.0
  %1865 = vmatpush1.msra.mxu0 %v1840
  %1866 = vmatprep.subr.mxu0 0.0
  %1867 = vmatpush1.msra.mxu0 %v1841
  %1868 = vmatprep.subr.mxu0 0.0
  %1869 = vmatpush1.msra.mxu0 %v1842
  %1870 = vmatprep.subr.mxu0 0.0
  %1871 = vmatpush1.msra.mxu0 %v1843
  %1872 = vmatprep.subr.mxu0 0.0
  %1873 = vmatpush1.msra.mxu0 %v1844
  %1874 = vmatprep.subr.mxu0 0.0
  %1875 = vmatpush1.msra.mxu0 %v1845
  %1876 = vmatprep.subr.mxu0 0.0
  %1877 = vmatpush1.msra.mxu0 %v1846
  %1878 = vmatprep.subr.mxu0 0.0
  %1879 = vmatpush1.msra.mxu0 %v1847
  %1880 = vmatprep.subr.mxu0 0.0
  %1881 = vmatpush1.msra.mxu0 %v1848
  %1882 = vmatprep.subr.mxu0 0.0
  %1883 = vmatpush1.msra.mxu0 %v1849
  %1884 = vmatprep.subr.mxu0 0.0
  %1885 = vmatpush1.msra.mxu0 %v1850
  %1886 = vmatprep.subr.mxu0 0.0
  %1887 = vmatpush1.msra.mxu0 %v1851
  %1888 = vmatprep.subr.mxu0 0.0
  %1889 = vmatpush1.msra.mxu0 %v1852
  %1890 = vmatprep.subr.mxu0 0.0
  %1891 = vmatpush1.msra.mxu0 0.0
  %1892 = vmatprep.subr.mxu0 0.0
  %1893 = vmatpush1.msra.mxu0 0.0
  %1894 = vmatprep.subr.mxu0 0.0
  %1895 = vmatpush1.msra.mxu0 0.0
  %1896 = vmatprep.subr.mxu0 0.0
  %1897 = vmatpush1.msra.mxu0 0.0
  %1898 = vmatprep.subr.mxu0 0.0
  %1899 = vmatpush1.msra.mxu0 0.0
  %1900 = vmatprep.subr.mxu0 0.0
  %1901 = vmatpush1.msra.mxu0 0.0
  %1902 = vmatprep.subr.mxu0 0.0
  %1903 = vmatpush1.msra.mxu0 0.0
  %1904 = vmatprep.subr.mxu0 0.0
  %1905 = vmatpush1.msra.mxu0 0.0
  %1906 = vmatprep.subr.mxu0 0.0
  %1907 = vmatpush1.msra.mxu0 0.0
  %1908 = vmatprep.subr.mxu0 0.0
  %1909 = vmatpush1.msra.mxu0 0.0
  %1910 = vmatprep.subr.mxu0 0.0
  %1911 = vmatpush1.msra.mxu0 0.0
  %1912 = vmatprep.subr.mxu0 0.0
  %1913 = vmatpush1.msra.mxu0 0.0
  %1914 = vmatprep.subr.mxu0 0.0
  %1915 = vmatpush1.msra.mxu0 0.0
  %1916 = vmatprep.subr.mxu0 0.0
  %1917 = vmatpush1.msra.mxu0 0.0
  %1918 = vmatprep.subr.mxu0 0.0
  %1919 = vmatpush1.msra.mxu0 0.0
  %1920 = vmatprep.subr.mxu0 0.0
  %1921 = vmatpush1.msra.mxu0 0.0
  %1922 = vmatprep.mubr.f32.mxu0 0.0
  %1923 = vmatmul.mubr.f32.gmra.mrb[0].mxu0 %v1835
  %v1924 = vpop.f32.mrb[0].mxu0
  %v1925 = vadd.f32 %v1857, %v1924
  %v1926 = vpop.f32.mrb[0].mxu0
  %1927 = vmatprep.mubr.f32.mxu0 0.0
  %1928 = vmatmul.mubr.f32.gmra.mrb[0].mxu0 %v1836
  %v1929 = vpop.f32.mrb[0].mxu0
  %v1930 = vadd.f32 %v1857, %v1929
  %v1931 = vpop.f32.mrb[0].mxu0
  %1932 = vdwg.mxu0
  %v1933 = vadd.f32 %v1727, %v1925
  %v1934 = vadd.f32 %v1728, %v1930
  %v1935 = vld [vmem:[%s4 + $0x16] sm:$0x1]
  %v1936 = vld [vmem:[%s4 + $0x17] sm:$0x1]
  %v1937 = vsel %vm137, %v1933, 0.0
  %1938 = vadd.xlane.f32.xlu0 %v1937
  %v1939 = vpop.xlane.xlu0 %1938
  %v1940 = vsel %vm137, %v1934, 0.0
  %1941 = vadd.xlane.f32.xlu0 %v1940
  %v1942 = vpop.xlane.xlu0 %1941
  %v1943 = vmul.f32 %v1939, %v144
  %v1944 = vmul.f32 %v1942, %v144
  %v1945 = vsub.f32 %v1933, %v1943
  %v1946 = vsub.f32 %v1934, %v1944
  %v1947 = vmul.f32 %v1945, %v1945
  %v1948 = vmul.f32 %v1946, %v1946
  %v1949 = vsel %vm137, %v1947, 0.0
  %1950 = vadd.xlane.f32.xlu0 %v1949
  %v1951 = vpop.xlane.xlu0 %1950
  %v1952 = vsel %vm137, %v1948, 0.0
  %1953 = vadd.xlane.f32.xlu0 %v1952
  %v1954 = vpop.xlane.xlu0 %1953
  %v1955 = vmul.f32 %v1951, %v144
  %v1956 = vmul.f32 %v1954, %v144
  %v1957 = vadd.f32 %v1955, 1e-12
  %v1958 = vadd.f32 %v1956, 1e-12
  %v1959 = vrsqrt.pop %v1957
  %v1960 = vrsqrt.pop %v1958
  %v1961 = vmul.f32 %v1945, %v1959
  %v1962 = vmul.f32 %v1946, %v1960
  %v1963 = vlaneseq
  %v1964 = vshrl.u32 %v1963, 7
  %v1965 = vsub.s32 0, %v1964
  %v1966 = vrot.slane %v1935, %v1965
  %v1967 = vmul.f32 %v1961, %v1966
  %v1968 = vmul.f32 %v1962, %v1966
  %v1969 = vlaneseq
  %v1970 = vshrl.u32 %v1969, 7
  %v1971 = vsub.s32 0, %v1970
  %v1972 = vrot.slane %v1936, %v1971
  %v1973 = vadd.f32 %v1967, %v1972
  %v1974 = vadd.f32 %v1968, %v1972
  %v1975 = vld [vmem:[%s2 + $0x90] sm:$0xff]
  %v1976 = vld [vmem:[%s2 + $0x98] sm:$0xff]
  %v1977 = vld [vmem:[%s2 + $0xa0] sm:$0xff]
  %v1978 = vld [vmem:[%s2 + $0xa8] sm:$0xff]
  %v1979 = vld [vmem:[%s4 + $0x3] sm:$0x1]
  %v1980 = vlaneseq
  %v1981 = vshrl.u32 %v1980, 7
  %v1982 = vsub.s32 0, %v1981
  %v1983 = vrot.slane %v1979, %v1982
  %v1985 = vsel %vm137, %v1973, 0
  %v1988 = vsel %vm137, %v1974, 0
  %1990 = vmatprep.subr.mxu0 0.0
  %1991 = vmatpush1.msra.mxu0 %v1975
  %1992 = vmatprep.subr.mxu0 0.0
  %1993 = vmatpush1.msra.mxu0 %v1976
  %1994 = vmatprep.subr.mxu0 0.0
  %1995 = vmatpush1.msra.mxu0 %v1977
  %1996 = vmatprep.subr.mxu0 0.0
  %1997 = vmatpush1.msra.mxu0 %v1978
  %1998 = vmatprep.subr.mxu0 0.0
  %1999 = vmatpush1.msra.mxu0 0.0
  %2000 = vmatprep.subr.mxu0 0.0
  %2001 = vmatpush1.msra.mxu0 0.0
  %2002 = vmatprep.subr.mxu0 0.0
  %2003 = vmatpush1.msra.mxu0 0.0
  %2004 = vmatprep.subr.mxu0 0.0
  %2005 = vmatpush1.msra.mxu0 0.0
  %2006 = vmatprep.subr.mxu0 0.0
  %2007 = vmatpush1.msra.mxu0 0.0
  %2008 = vmatprep.subr.mxu0 0.0
  %2009 = vmatpush1.msra.mxu0 0.0
  %2010 = vmatprep.subr.mxu0 0.0
  %2011 = vmatpush1.msra.mxu0 0.0
  %2012 = vmatprep.subr.mxu0 0.0
  %2013 = vmatpush1.msra.mxu0 0.0
  %2014 = vmatprep.subr.mxu0 0.0
  %2015 = vmatpush1.msra.mxu0 0.0
  %2016 = vmatprep.subr.mxu0 0.0
  %2017 = vmatpush1.msra.mxu0 0.0
  %2018 = vmatprep.subr.mxu0 0.0
  %2019 = vmatpush1.msra.mxu0 0.0
  %2020 = vmatprep.subr.mxu0 0.0
  %2021 = vmatpush1.msra.mxu0 0.0
  %2022 = vmatprep.subr.mxu0 0.0
  %2023 = vmatpush1.msra.mxu0 0.0
  %2024 = vmatprep.subr.mxu0 0.0
  %2025 = vmatpush1.msra.mxu0 0.0
  %2026 = vmatprep.subr.mxu0 0.0
  %2027 = vmatpush1.msra.mxu0 0.0
  %2028 = vmatprep.subr.mxu0 0.0
  %2029 = vmatpush1.msra.mxu0 0.0
  %2030 = vmatprep.subr.mxu0 0.0
  %2031 = vmatpush1.msra.mxu0 0.0
  %2032 = vmatprep.subr.mxu0 0.0
  %2033 = vmatpush1.msra.mxu0 0.0
  %2034 = vmatprep.subr.mxu0 0.0
  %2035 = vmatpush1.msra.mxu0 0.0
  %2036 = vmatprep.subr.mxu0 0.0
  %2037 = vmatpush1.msra.mxu0 0.0
  %2038 = vmatprep.subr.mxu0 0.0
  %2039 = vmatpush1.msra.mxu0 0.0
  %2040 = vmatprep.subr.mxu0 0.0
  %2041 = vmatpush1.msra.mxu0 0.0
  %2042 = vmatprep.subr.mxu0 0.0
  %2043 = vmatpush1.msra.mxu0 0.0
  %2044 = vmatprep.subr.mxu0 0.0
  %2045 = vmatpush1.msra.mxu0 0.0
  %2046 = vmatprep.subr.mxu0 0.0
  %2047 = vmatpush1.msra.mxu0 0.0
  %2048 = vmatprep.subr.mxu0 0.0
  %2049 = vmatpush1.msra.mxu0 0.0
  %2050 = vmatprep.subr.mxu0 0.0
  %2051 = vmatpush1.msra.mxu0 0.0
  %2052 = vmatprep.subr.mxu0 0.0
  %2053 = vmatpush1.msra.mxu0 0.0
  %2054 = vmatprep.mubr.f32.mxu0 0.0
  %2055 = vmatmul.mubr.f32.gmra.mrb[0].mxu0 %v1985
  %v2056 = vpop.f32.mrb[0].mxu0
  %v2057 = vadd.f32 %v1983, %v2056
  %v2058 = vpop.f32.mrb[0].mxu0
  %2059 = vmatprep.mubr.f32.mxu0 0.0
  %2060 = vmatmul.mubr.f32.gmra.mrb[0].mxu0 %v1988
  %v2061 = vpop.f32.mrb[0].mxu0
  %v2062 = vadd.f32 %v1983, %v2061
  %v2063 = vpop.f32.mrb[0].mxu0
  %2064 = vdwg.mxu0
  %v2065 = vmax.f32 %v2057, 0.0
  %v2066 = vmax.f32 %v2062, 0.0
  %v2067 = vld [vmem:[%s3 + $0x80] sm:$0xff]
  %v2068 = vld [vmem:[%s3 + $0x88] sm:$0xff]
  %v2069 = vld [vmem:[%s3 + $0x90] sm:$0xff]
  %v2070 = vld [vmem:[%s3 + $0x98] sm:$0xff]
  %v2071 = vld [vmem:[%s4 + $0x4] sm:$0x1]
  %v2072 = vlaneseq
  %v2073 = vshrl.u32 %v2072, 7
  %v2074 = vsub.s32 0, %v2073
  %v2075 = vrot.slane %v2071, %v2074
  %v2077 = vsel %vm137, %v2065, 0
  %v2080 = vsel %vm137, %v2066, 0
  %2082 = vmatprep.subr.mxu0 0.0
  %2083 = vmatpush1.msra.mxu0 %v2067
  %2084 = vmatprep.subr.mxu0 0.0
  %2085 = vmatpush1.msra.mxu0 %v2068
  %2086 = vmatprep.subr.mxu0 0.0
  %2087 = vmatpush1.msra.mxu0 %v2069
  %2088 = vmatprep.subr.mxu0 0.0
  %2089 = vmatpush1.msra.mxu0 %v2070
  %2090 = vmatprep.subr.mxu0 0.0
  %2091 = vmatpush1.msra.mxu0 0.0
  %2092 = vmatprep.subr.mxu0 0.0
  %2093 = vmatpush1.msra.mxu0 0.0
  %2094 = vmatprep.subr.mxu0 0.0
  %2095 = vmatpush1.msra.mxu0 0.0
  %2096 = vmatprep.subr.mxu0 0.0
  %2097 = vmatpush1.msra.mxu0 0.0
  %2098 = vmatprep.subr.mxu0 0.0
  %2099 = vmatpush1.msra.mxu0 0.0
  %2100 = vmatprep.subr.mxu0 0.0
  %2101 = vmatpush1.msra.mxu0 0.0
  %2102 = vmatprep.subr.mxu0 0.0
  %2103 = vmatpush1.msra.mxu0 0.0
  %2104 = vmatprep.subr.mxu0 0.0
  %2105 = vmatpush1.msra.mxu0 0.0
  %2106 = vmatprep.subr.mxu0 0.0
  %2107 = vmatpush1.msra.mxu0 0.0
  %2108 = vmatprep.subr.mxu0 0.0
  %2109 = vmatpush1.msra.mxu0 0.0
  %2110 = vmatprep.subr.mxu0 0.0
  %2111 = vmatpush1.msra.mxu0 0.0
  %2112 = vmatprep.subr.mxu0 0.0
  %2113 = vmatpush1.msra.mxu0 0.0
  %2114 = vmatprep.subr.mxu0 0.0
  %2115 = vmatpush1.msra.mxu0 0.0
  %2116 = vmatprep.subr.mxu0 0.0
  %2117 = vmatpush1.msra.mxu0 0.0
  %2118 = vmatprep.subr.mxu0 0.0
  %2119 = vmatpush1.msra.mxu0 0.0
  %2120 = vmatprep.subr.mxu0 0.0
  %2121 = vmatpush1.msra.mxu0 0.0
  %2122 = vmatprep.subr.mxu0 0.0
  %2123 = vmatpush1.msra.mxu0 0.0
  %2124 = vmatprep.subr.mxu0 0.0
  %2125 = vmatpush1.msra.mxu0 0.0
  %2126 = vmatprep.subr.mxu0 0.0
  %2127 = vmatpush1.msra.mxu0 0.0
  %2128 = vmatprep.subr.mxu0 0.0
  %2129 = vmatpush1.msra.mxu0 0.0
  %2130 = vmatprep.subr.mxu0 0.0
  %2131 = vmatpush1.msra.mxu0 0.0
  %2132 = vmatprep.subr.mxu0 0.0
  %2133 = vmatpush1.msra.mxu0 0.0
  %2134 = vmatprep.subr.mxu0 0.0
  %2135 = vmatpush1.msra.mxu0 0.0
  %2136 = vmatprep.subr.mxu0 0.0
  %2137 = vmatpush1.msra.mxu0 0.0
  %2138 = vmatprep.subr.mxu0 0.0
  %2139 = vmatpush1.msra.mxu0 0.0
  %2140 = vmatprep.subr.mxu0 0.0
  %2141 = vmatpush1.msra.mxu0 0.0
  %2142 = vmatprep.subr.mxu0 0.0
  %2143 = vmatpush1.msra.mxu0 0.0
  %2144 = vmatprep.subr.mxu0 0.0
  %2145 = vmatpush1.msra.mxu0 0.0
  %2146 = vmatprep.mubr.f32.mxu0 0.0
  %2147 = vmatmul.mubr.f32.gmra.mrb[0].mxu0 %v2077
  %v2148 = vpop.f32.mrb[0].mxu0
  %v2149 = vadd.f32 %v2075, %v2148
  %v2150 = vpop.f32.mrb[0].mxu0
  %2151 = vmatprep.mubr.f32.mxu0 0.0
  %2152 = vmatmul.mubr.f32.gmra.mrb[0].mxu0 %v2080
  %v2153 = vpop.f32.mrb[0].mxu0
  %v2154 = vadd.f32 %v2075, %v2153
  %v2155 = vpop.f32.mrb[0].mxu0
  %2156 = vdwg.mxu0
  %2157 = vst [vmem:[%s5] sm:$0xff] %v2149
  %2158 = vst [vmem:[%s5 + $0x8] sm:$0xff] %v2154
  // Predicated region
  $region22: #{forward.1} parent=0 // pred_check
    _
  $region23: #{forward.1} parent=0 // pred_check_branch
    %2160 = sbr.rel (0) target = $region25
  $region24: #{forward.1} parent=0 // pred_region
    _
  $region25: #{forward.1} parent=0 // pred_fallthru
    _
  // Predicated region
  $region26: #{forward.1} parent=0 // pred_check
    _
  $region27: #{forward.1} parent=0 // pred_check_branch
    %2162 = sbr.rel (0) target = $region29
  $region28: #{forward.1} parent=0 // pred_region
    _
  $region29: #{forward.1} parent=0 // pred_fallthru
    _

</llo_original>
